<compile_context>
chip_gen: v7x
topology: tpu7x:2x2x1
jax: 0.10.0
libtpu: 0.0.40
codegen_flags: <defaults>
</compile_context>

<pallas_src>
import functools
import math

import jax
import jax.numpy as jnp
from jax.experimental import pallas as pl
from jax.experimental.pallas import tpu as pltpu


def _transparse_kernel(norm, margin, D, gather, seed_ref,
                       s_ref, t_ref, emat_ref, rmat_ref,
                       e4_ref, re_ref, ridx_ref, thr_ref, out_ref):
    """Per-batch-block body.

    s_ref/t_ref : (L, D*D) resident relation tables (gather=True)
                  or (TB, D*D) pre-gathered rows     (gather=False)
    emat_ref    : (D, D*D) bf16 lane-expand matrix   E[j, k] = (k % D == j)
    rmat_ref    : (D*D, D) f32 block-reduce matrix   R[k, i] = (k // D == i)
    e4_ref      : (4, TB, D) f32  [sp_e, tp_e, sn_e, tn_e]
    re_ref      : (TB, D)   f32   relation embedding
    ridx_ref    : (TB, 1)   int32 relation index
    thr_ref     : (TB, 4)   int32 8-bit keep thresholds (round(theta_eff*256))
    out_ref     : (TB, 1)   f32   per-example hinge loss
    """
    f32 = jnp.float32
    TB = out_ref.shape[0]
    DD = D * D

    # ---- per-example transfer matrices -----------------------------------
    if gather:
        # Exact gather of the TB needed rows from the VMEM-resident relation
        # tables via a one-hot MXU matmul (0/1 lhs, f32 accumulation).
        L = s_ref.shape[0]
        lane = jax.lax.broadcasted_iota(jnp.int32, (TB, L), 1)
        onehot = (lane == ridx_ref[...]).astype(f32)                  # (TB, L)
        ms = jnp.dot(onehot, s_ref[...], preferred_element_type=f32)  # (TB, DD)
        mt = jnp.dot(onehot, t_ref[...], preferred_element_type=f32)
    else:
        ms = s_ref[...]
        mt = t_ref[...]

    # ---- one 32-bit hash per matrix element, one byte per projection -----
    # TODO(synk): torch builds a fixed-count randperm-rank mask; an in-kernel
    # sort has no clean Pallas equivalent, so a Bernoulli keep-mask with the
    # same expected density (8-bit threshold) is used instead.
    row = jax.lax.broadcasted_iota(jnp.int32, (TB, DD), 0)
    col = jax.lax.broadcasted_iota(jnp.int32, (TB, DD), 1)
    row0 = pl.program_id(0) * TB
    gid = (row + row0) * DD + col                                     # int32
    # murmur3 fmix32, all in int32 (logical shifts emulated with masks so the
    # bit pattern is identical to the uint32 reference).
    h = gid * jnp.int32(-1640531527)                 # * 0x9E3779B9
    h = h ^ (seed_ref[0] * jnp.int32(-1028477387))   # mix the seed in
    h = h ^ ((h >> 16) & 0xFFFF)
    h = h * jnp.int32(-2048144789)                   # * 0x85EBCA6B
    h = h ^ ((h >> 13) & 0x7FFFF)
    h = h * jnp.int32(-1028477387)                   # * 0xC2B2AE35
    h = h ^ ((h >> 16) & 0xFFFF)
    thr = thr_ref[...]                                                # (TB, 4)

    # ---- lane-expand all four node embeddings with one bf16 MXU matmul ---
    e4 = e4_ref[...].reshape(4 * TB, D).astype(jnp.bfloat16)
    e_t = jnp.dot(e4, emat_ref[...], preferred_element_type=f32)      # (4TB,DD)

    def masked(m, c):
        b = (h >> (8 * c)) & 0xFF if c else (h & 0xFF)                # byte c
        keep = b < thr[:, c:c + 1]
        return jnp.where(keep, m * e_t[c * TB:(c + 1) * TB], f32(0.0))

    # Stack the four masked (M ⊙ e_tiled) blocks and reduce with a single
    # (4TB, DD) @ (DD, D) matmul == four batched mat-vecs M_masked @ e.
    prod = jnp.concatenate(
        [masked(ms, 0), masked(mt, 1), masked(ms, 2), masked(mt, 3)], axis=0)
    proj = jnp.dot(prod, rmat_ref[...], preferred_element_type=f32)   # (4TB, D)

    r_e = re_ref[...]                                                 # (TB, D)

    def dist(s, t):
        x = s + r_e - t
        if norm == 1:
            return jnp.sum(jnp.abs(x), axis=1, keepdims=True)
        if norm == 2:
            return jnp.sqrt(jnp.sum(x * x, axis=1, keepdims=True))
        return jnp.sum(jnp.abs(x) ** norm, axis=1, keepdims=True) ** (1.0 / norm)

    pos = dist(proj[0:TB], proj[TB:2 * TB])                           # (TB, 1)
    neg = dist(proj[2 * TB:3 * TB], proj[3 * TB:4 * TB])              # (TB, 1)
    # nn.MarginRankingLoss(margin, reduction='none') with target = -1.
    out_ref[...] = jnp.maximum(f32(0.0), pos - neg + f32(margin))


def transparse_forward(params, sp, tp, sn, tn, r, mask_seed, *,
                       norm, margin, theta, block_b=1024):
    node_emb = params["node_emb"].astype(jnp.float32)        # (N, D)
    link_emb = params["link_emb"].astype(jnp.float32)        # (L, D)
    s_tbl = params["s_transfer"].astype(jnp.float32)         # (L, D*D)
    t_tbl = params["t_transfer"].astype(jnp.float32)         # (L, D*D)
    deg = params["node_degree"].astype(jnp.float32)          # (N, L, 2)
    deg_max = jnp.max(params["node_degree"], axis=0).astype(jnp.float32)  # (L, 2)

    B = int(sp.shape[0])
    D = int(node_emb.shape[1])
    DD = D * D
    L = int(link_emb.shape[0])

    # Small embedding-table gathers stay in XLA (tiny), packed per-projection.
    e4 = jnp.stack([node_emb[sp], node_emb[tp], node_emb[sn], node_emb[tn]],
                   axis=0)                                   # (4, B, D)
    r_e = link_emb[r]                                        # (B, D)
    r_idx = r.astype(jnp.int32).reshape(B, 1)                # (B, 1)

    # Effective keep-probability per example / projection -> 8-bit thresholds.
    def keep_prob(nodes, col):
        d = deg[nodes, r, col]
        dmax = deg_max[r, col]
        return 1.0 - (1.0 - theta) * d / dmax

    p = jnp.stack([keep_prob(sp, 0), keep_prob(tp, 1),
                   keep_prob(sn, 0), keep_prob(tn, 1)], axis=1)       # (B, 4)
    thr = jnp.clip(jnp.round(p * 256.0), 0.0, 256.0).astype(jnp.int32)

    # Constant lane-expand / block-reduce matrices, built once on the host.
    jj = jax.lax.broadcasted_iota(jnp.int32, (D, DD), 0)
    kk = jax.lax.broadcasted_iota(jnp.int32, (D, DD), 1)
    e_mat = (kk % D == jj).astype(jnp.bfloat16)              # (D, DD)
    kr = jax.lax.broadcasted_iota(jnp.int32, (DD, D), 0)
    ir = jax.lax.broadcasted_iota(jnp.int32, (DD, D), 1)
    r_mat = (kr // D == ir).astype(jnp.float32)              # (DD, D)

    # ---- VMEM-aware batch tiling ------------------------------------------
    try:
        phys_vmem = int(pltpu.get_tpu_info().vmem_capacity_bytes)
    except Exception:
        phys_vmem = 64 * 1024 * 1024          # conservative (v7x-sized) default
    vmem_limit = int(min(phys_vmem * 3 // 4, 96 * 1024 * 1024))

    table_bytes = 2 * L * DD * 4
    gather_in_kernel = table_bytes <= min(vmem_limit // 2, 32 * 1024 * 1024)
    if gather_in_kernel:
        s_in, t_in = s_tbl, t_tbl
    else:
        # TODO(synk): for relation tables too large to stay VMEM-resident we
        # fall back to a host-side gather and stream (TB, D*D) blocks.
        s_in, t_in = s_tbl[r], t_tbl[r]

    resident = (table_bytes if gather_in_kernel else 0) + D * DD * 2 + DD * D * 4
    avail = max(vmem_limit - resident - 6 * 1024 * 1024, 1 * 1024 * 1024)
    per_row = 80 * DD + 64 * D + 128          # rough live bytes per batch row
    tb_cap = max(8, avail // per_row)

    TB = int(min(block_b, tb_cap, ((B + 7) // 8) * 8))
    if B >= 16:
        # Keep >= 2 grid steps so the "parallel" axis can shard across v7x's
        # two TensorCores.
        TB = min(TB, (((B + 1) // 2) + 7) // 8 * 8)
    TB = max(8, (TB // 8) * 8)
    G = -(-B // TB)
    B_pad = G * TB

    pad = B_pad - B
    if pad:
        e4 = jnp.pad(e4, ((0, 0), (0, pad), (0, 0)))
        r_e = jnp.pad(r_e, ((0, pad), (0, 0)))
        r_idx = jnp.pad(r_idx, ((0, pad), (0, 0)))
        thr = jnp.pad(thr, ((0, pad), (0, 0)))
        if not gather_in_kernel:
            s_in = jnp.pad(s_in, ((0, pad), (0, 0)))
            t_in = jnp.pad(t_in, ((0, pad), (0, 0)))

    if gather_in_kernel:
        s_spec = pl.BlockSpec((L, DD), lambda i, s: (0, 0))     # resident
        t_spec = pl.BlockSpec((L, DD), lambda i, s: (0, 0))     # resident
    else:
        s_spec = pl.BlockSpec((TB, DD), lambda i, s: (i, 0))
        t_spec = pl.BlockSpec((TB, DD), lambda i, s: (i, 0))

    seed_arr = jnp.asarray([mask_seed], dtype=jnp.int32)
    kernel = functools.partial(_transparse_kernel, norm, margin, D,
                               gather_in_kernel)

    per_example = pl.pallas_call(
        kernel,
        out_shape=jax.ShapeDtypeStruct((B_pad, 1), jnp.float32),
        grid_spec=pltpu.PrefetchScalarGridSpec(
            num_scalar_prefetch=1,
            grid=(G,),
            in_specs=[
                s_spec,
                t_spec,
                pl.BlockSpec((D, DD), lambda i, s: (0, 0)),     # E (resident)
                pl.BlockSpec((DD, D), lambda i, s: (0, 0)),     # R (resident)
                pl.BlockSpec((4, TB, D), lambda i, s: (0, i, 0)),
                pl.BlockSpec((TB, D), lambda i, s: (i, 0)),
                pl.BlockSpec((TB, 1), lambda i, s: (i, 0)),
                pl.BlockSpec((TB, 4), lambda i, s: (i, 0)),
            ],
            out_specs=pl.BlockSpec((TB, 1), lambda i, s: (i, 0)),
        ),
        compiler_params=pltpu.CompilerParams(
            dimension_semantics=("parallel",),
            vmem_limit_bytes=vmem_limit,
        ),
    )(seed_arr, s_in, t_in, e_mat, r_mat, e4, r_e, r_idx, thr)

    # Mean over the real batch (padded rows excluded) == torch.mean(loss).
    return jnp.sum(per_example[:B, 0]) / B


if __name__ == "__main__":
    key = jax.random.PRNGKey(0)
    node_size, link_size, dim, batch = 16, 4, 32, 8
    norm, margin, theta = 2, 1.0, 0.5

    (k_ne, k_le, k_s, k_t, k_deg,
     k_sp, k_tp, k_sn, k_tn, k_r) = jax.random.split(key, 10)

    ur_e = 6.0 / math.sqrt(dim)   # embedding init range, as in the module
    ur_m = 6.0 / dim              # transfer-matrix init range
    params = {
        "node_emb": jax.random.uniform(k_ne, (node_size, dim), jnp.float32, -ur_e, ur_e),
        "link_emb": jax.random.uniform(k_le, (link_size, dim), jnp.float32, -ur_e, ur_e),
        "s_transfer": jax.random.uniform(k_s, (link_size, dim * dim), jnp.float32, -ur_m, ur_m),
        "t_transfer": jax.random.uniform(k_t, (link_size, dim * dim), jnp.float32, -ur_m, ur_m),
        # degrees >= 1 so node_degree_max is never zero
        "node_degree": jax.random.randint(k_deg, (node_size, link_size, 2), 1, 16, jnp.int32),
    }

    sp = jax.random.randint(k_sp, (batch,), 0, node_size, jnp.int32)
    tp = jax.random.randint(k_tp, (batch,), 0, node_size, jnp.int32)
    sn = jax.random.randint(k_sn, (batch,), 0, node_size, jnp.int32)
    tn = jax.random.randint(k_tn, (batch,), 0, node_size, jnp.int32)
    r = jax.random.randint(k_r, (batch,), 0, link_size, jnp.int32)

    loss = transparse_forward(params, sp, tp, sn, tn, r, mask_seed=0,
                              norm=norm, margin=margin, theta=theta)
    loss = jax.block_until_ready(loss)
    assert bool(jnp.isfinite(loss)), "loss is not finite"
    print("KERNEL_OK")
</pallas_src>

<mosaic_0001>
module attributes {stable_mosaic.version = 11 : i64} {
  func.func @_transparse_kernel(%arg0: i32, %arg1: memref<1xi32, #tpu.memory_space<smem>>, %arg2: memref<4x1024xf32, #tpu.memory_space<vmem>>, %arg3: memref<4x1024xf32, #tpu.memory_space<vmem>>, %arg4: memref<32x1024xbf16, #tpu.memory_space<vmem>>, %arg5: memref<1024x32xf32, #tpu.memory_space<vmem>>, %arg6: memref<4x8x32xf32, #tpu.memory_space<vmem>>, %arg7: memref<8x32xf32, #tpu.memory_space<vmem>>, %arg8: memref<8x1xi32, #tpu.memory_space<vmem>>, %arg9: memref<8x4xi32, #tpu.memory_space<vmem>>, %arg10: memref<8x1xf32, #tpu.memory_space<vmem>>) attributes {dimension_semantics = [#tpu.dimension_semantics<parallel>], iteration_bounds = array<i64: 1>, scalar_prefetch = 1 : i64, scratch_operands = 0 : i64, tpu.core_type = #tpu.core_type<tc>, window_params = [{pipeline_mode = #tpu.pipeline_mode<synchronous>, transform_indices = @transform_0, window_bounds = array<i64: 4, 1024>}, {pipeline_mode = #tpu.pipeline_mode<synchronous>, transform_indices = @transform_1, window_bounds = array<i64: 4, 1024>}, {pipeline_mode = #tpu.pipeline_mode<synchronous>, transform_indices = @transform_2, window_bounds = array<i64: 32, 1024>}, {pipeline_mode = #tpu.pipeline_mode<synchronous>, transform_indices = @transform_3, window_bounds = array<i64: 1024, 32>}, {transform_indices = @transform_4, window_bounds = array<i64: 4, 8, 32>}, {transform_indices = @transform_5, window_bounds = array<i64: 8, 32>}, {transform_indices = @transform_6, window_bounds = array<i64: 8, 1>}, {transform_indices = @transform_7, window_bounds = array<i64: 8, 4>}, {transform_indices = @transform_8, window_bounds = array<i64: 8, 1>}]} {
    %0 = tpu.iota {dimensions = array<i32: 1>} : vector<8x4xi32>
    %c0 = arith.constant 0 : index
    %c0_0 = arith.constant 0 : index
    %1 = vector.load %arg8[%c0, %c0_0] : memref<8x1xi32, #tpu.memory_space<vmem>>, vector<8x1xi32>
    %2 = vector.broadcast %1 : vector<8x1xi32> to vector<8x4xi32>
    %3 = arith.cmpi eq, %0, %2 : vector<8x4xi32>
    %4 = arith.extui %3 : vector<8x4xi1> to vector<8x4xi32>
    %5 = arith.sitofp %4 : vector<8x4xi32> to vector<8x4xf32>
    %c0_1 = arith.constant 0 : index
    %c0_2 = arith.constant 0 : index
    %6 = vector.load %arg2[%c0_1, %c0_2] : memref<4x1024xf32, #tpu.memory_space<vmem>>, vector<4x1024xf32>
    %cst = arith.constant dense<0.000000e+00> : vector<8x1024xf32>
    %7 = tpu.matmul %5, %6, %cst {dimension_numbers = #tpu.dot_dimension_numbers<[1], [0], [0], [1], [0, 0, 1, 1], [], []>} : vector<8x4xf32>, vector<4x1024xf32>, vector<8x1024xf32> -> vector<8x1024xf32>
    %c0_3 = arith.constant 0 : index
    %c0_4 = arith.constant 0 : index
    %8 = vector.load %arg3[%c0_3, %c0_4] : memref<4x1024xf32, #tpu.memory_space<vmem>>, vector<4x1024xf32>
    %cst_5 = arith.constant dense<0.000000e+00> : vector<8x1024xf32>
    %9 = tpu.matmul %5, %8, %cst_5 {dimension_numbers = #tpu.dot_dimension_numbers<[1], [0], [0], [1], [0, 0, 1, 1], [], []>} : vector<8x4xf32>, vector<4x1024xf32>, vector<8x1024xf32> -> vector<8x1024xf32>
    %10 = tpu.iota {dimensions = array<i32: 0>} : vector<8x1024xi32>
    %11 = tpu.iota {dimensions = array<i32: 1>} : vector<8x1024xi32>
    %c8_i32 = arith.constant 8 : i32
    %12 = arith.muli %arg0, %c8_i32 : i32
    %13 = vector.broadcast %12 : i32 to vector<8x1024xi32>
    %14 = arith.addi %10, %13 : vector<8x1024xi32>
    %c1024_i32 = arith.constant 1024 : i32
    %15 = vector.broadcast %c1024_i32 : i32 to vector<8x1024xi32>
    %16 = arith.muli %14, %15 : vector<8x1024xi32>
    %17 = arith.addi %16, %11 : vector<8x1024xi32>
    %c-1640531527_i32 = arith.constant -1640531527 : i32
    %18 = vector.broadcast %c-1640531527_i32 : i32 to vector<8x1024xi32>
    %19 = arith.muli %17, %18 : vector<8x1024xi32>
    %c0_6 = arith.constant 0 : index
    %20 = memref.load %arg1[%c0_6] : memref<1xi32, #tpu.memory_space<smem>>
    %c-1028477387_i32 = arith.constant -1028477387 : i32
    %21 = arith.muli %20, %c-1028477387_i32 : i32
    %22 = vector.broadcast %21 : i32 to vector<8x1024xi32>
    %23 = arith.xori %19, %22 : vector<8x1024xi32>
    %c16_i32 = arith.constant 16 : i32
    %24 = vector.broadcast %c16_i32 : i32 to vector<8x1024xi32>
    %25 = arith.shrsi %23, %24 : vector<8x1024xi32>
    %c65535_i32 = arith.constant 65535 : i32
    %26 = vector.broadcast %c65535_i32 : i32 to vector<8x1024xi32>
    %27 = arith.andi %25, %26 : vector<8x1024xi32>
    %28 = arith.xori %23, %27 : vector<8x1024xi32>
    %c-2048144789_i32 = arith.constant -2048144789 : i32
    %29 = vector.broadcast %c-2048144789_i32 : i32 to vector<8x1024xi32>
    %30 = arith.muli %28, %29 : vector<8x1024xi32>
    %c13_i32 = arith.constant 13 : i32
    %31 = vector.broadcast %c13_i32 : i32 to vector<8x1024xi32>
    %32 = arith.shrsi %30, %31 : vector<8x1024xi32>
    %c524287_i32 = arith.constant 524287 : i32
    %33 = vector.broadcast %c524287_i32 : i32 to vector<8x1024xi32>
    %34 = arith.andi %32, %33 : vector<8x1024xi32>
    %35 = arith.xori %30, %34 : vector<8x1024xi32>
    %c-1028477387_i32_7 = arith.constant -1028477387 : i32
    %36 = vector.broadcast %c-1028477387_i32_7 : i32 to vector<8x1024xi32>
    %37 = arith.muli %35, %36 : vector<8x1024xi32>
    %c16_i32_8 = arith.constant 16 : i32
    %38 = vector.broadcast %c16_i32_8 : i32 to vector<8x1024xi32>
    %39 = arith.shrsi %37, %38 : vector<8x1024xi32>
    %c65535_i32_9 = arith.constant 65535 : i32
    %40 = vector.broadcast %c65535_i32_9 : i32 to vector<8x1024xi32>
    %41 = arith.andi %39, %40 : vector<8x1024xi32>
    %42 = arith.xori %37, %41 : vector<8x1024xi32>
    %c0_10 = arith.constant 0 : index
    %c0_11 = arith.constant 0 : index
    %43 = vector.load %arg9[%c0_10, %c0_11] : memref<8x4xi32, #tpu.memory_space<vmem>>, vector<8x4xi32>
    %c0_12 = arith.constant 0 : index
    %c0_13 = arith.constant 0 : index
    %c0_14 = arith.constant 0 : index
    %44 = vector.load %arg6[%c0_12, %c0_13, %c0_14] : memref<4x8x32xf32, #tpu.memory_space<vmem>>, vector<4x8x32xf32>
    %45 = vector.shape_cast %44 : vector<4x8x32xf32> to vector<32x32xf32>
    %46 = arith.truncf %45 : vector<32x32xf32> to vector<32x32xbf16>
    %c0_15 = arith.constant 0 : index
    %c0_16 = arith.constant 0 : index
    %47 = vector.load %arg4[%c0_15, %c0_16] : memref<32x1024xbf16, #tpu.memory_space<vmem>>, vector<32x1024xbf16>
    %cst_17 = arith.constant dense<0.000000e+00> : vector<32x1024xf32>
    %48 = tpu.matmul %46, %47, %cst_17 {dimension_numbers = #tpu.dot_dimension_numbers<[1], [0], [0], [1], [0, 0, 1, 1], [], []>} : vector<32x32xbf16>, vector<32x1024xbf16>, vector<32x1024xf32> -> vector<32x1024xf32>
    %c255_i32 = arith.constant 255 : i32
    %49 = vector.broadcast %c255_i32 : i32 to vector<8x1024xi32>
    %50 = arith.andi %42, %49 : vector<8x1024xi32>
    %51 = vector.extract_strided_slice %43 {offsets = [0, 0], sizes = [8, 1], strides = [1, 1]} : vector<8x4xi32> to vector<8x1xi32>
    %52 = vector.broadcast %51 : vector<8x1xi32> to vector<8x1024xi32>
    %53 = arith.cmpi slt, %50, %52 : vector<8x1024xi32>
    %54 = vector.extract_strided_slice %48 {offsets = [0, 0], sizes = [8, 1024], strides = [1, 1]} : vector<32x1024xf32> to vector<8x1024xf32>
    %55 = arith.mulf %7, %54 : vector<8x1024xf32>
    %cst_18 = arith.constant 0.000000e+00 : f32
    %56 = vector.broadcast %cst_18 : f32 to vector<8x1024xf32>
    %57 = arith.select %53, %55, %56 : vector<8x1024xi1>, vector<8x1024xf32>
    %c8_i32_19 = arith.constant 8 : i32
    %58 = vector.broadcast %c8_i32_19 : i32 to vector<8x1024xi32>
    %59 = arith.shrsi %42, %58 : vector<8x1024xi32>
    %c255_i32_20 = arith.constant 255 : i32
    %60 = vector.broadcast %c255_i32_20 : i32 to vector<8x1024xi32>
    %61 = arith.andi %59, %60 : vector<8x1024xi32>
    %62 = vector.extract_strided_slice %43 {offsets = [0, 1], sizes = [8, 1], strides = [1, 1]} : vector<8x4xi32> to vector<8x1xi32>
    %63 = vector.broadcast %62 : vector<8x1xi32> to vector<8x1024xi32>
    %64 = arith.cmpi slt, %61, %63 : vector<8x1024xi32>
    %65 = vector.extract_strided_slice %48 {offsets = [8, 0], sizes = [8, 1024], strides = [1, 1]} : vector<32x1024xf32> to vector<8x1024xf32>
    %66 = arith.mulf %9, %65 : vector<8x1024xf32>
    %cst_21 = arith.constant 0.000000e+00 : f32
    %67 = vector.broadcast %cst_21 : f32 to vector<8x1024xf32>
    %68 = arith.select %64, %66, %67 : vector<8x1024xi1>, vector<8x1024xf32>
    %c16_i32_22 = arith.constant 16 : i32
    %69 = vector.broadcast %c16_i32_22 : i32 to vector<8x1024xi32>
    %70 = arith.shrsi %42, %69 : vector<8x1024xi32>
    %c255_i32_23 = arith.constant 255 : i32
    %71 = vector.broadcast %c255_i32_23 : i32 to vector<8x1024xi32>
    %72 = arith.andi %70, %71 : vector<8x1024xi32>
    %73 = vector.extract_strided_slice %43 {offsets = [0, 2], sizes = [8, 1], strides = [1, 1]} : vector<8x4xi32> to vector<8x1xi32>
    %74 = vector.broadcast %73 : vector<8x1xi32> to vector<8x1024xi32>
    %75 = arith.cmpi slt, %72, %74 : vector<8x1024xi32>
    %76 = vector.extract_strided_slice %48 {offsets = [16, 0], sizes = [8, 1024], strides = [1, 1]} : vector<32x1024xf32> to vector<8x1024xf32>
    %77 = arith.mulf %7, %76 : vector<8x1024xf32>
    %cst_24 = arith.constant 0.000000e+00 : f32
    %78 = vector.broadcast %cst_24 : f32 to vector<8x1024xf32>
    %79 = arith.select %75, %77, %78 : vector<8x1024xi1>, vector<8x1024xf32>
    %c24_i32 = arith.constant 24 : i32
    %80 = vector.broadcast %c24_i32 : i32 to vector<8x1024xi32>
    %81 = arith.shrsi %42, %80 : vector<8x1024xi32>
    %c255_i32_25 = arith.constant 255 : i32
    %82 = vector.broadcast %c255_i32_25 : i32 to vector<8x1024xi32>
    %83 = arith.andi %81, %82 : vector<8x1024xi32>
    %84 = vector.extract_strided_slice %43 {offsets = [0, 3], sizes = [8, 1], strides = [1, 1]} : vector<8x4xi32> to vector<8x1xi32>
    %85 = vector.broadcast %84 : vector<8x1xi32> to vector<8x1024xi32>
    %86 = arith.cmpi slt, %83, %85 : vector<8x1024xi32>
    %87 = vector.extract_strided_slice %48 {offsets = [24, 0], sizes = [8, 1024], strides = [1, 1]} : vector<32x1024xf32> to vector<8x1024xf32>
    %88 = arith.mulf %9, %87 : vector<8x1024xf32>
    %cst_26 = arith.constant 0.000000e+00 : f32
    %89 = vector.broadcast %cst_26 : f32 to vector<8x1024xf32>
    %90 = arith.select %86, %88, %89 : vector<8x1024xi1>, vector<8x1024xf32>
    %91 = tpu.concatenate %57, %68, %79, %90 in 0 : vector<8x1024xf32>, vector<8x1024xf32>, vector<8x1024xf32>, vector<8x1024xf32> -> vector<32x1024xf32>
    %c0_27 = arith.constant 0 : index
    %c0_28 = arith.constant 0 : index
    %92 = vector.load %arg5[%c0_27, %c0_28] : memref<1024x32xf32, #tpu.memory_space<vmem>>, vector<1024x32xf32>
    %cst_29 = arith.constant dense<0.000000e+00> : vector<32x32xf32>
    %93 = tpu.matmul %91, %92, %cst_29 {dimension_numbers = #tpu.dot_dimension_numbers<[1], [0], [0], [1], [0, 0, 1, 1], [], []>} : vector<32x1024xf32>, vector<1024x32xf32>, vector<32x32xf32> -> vector<32x32xf32>
    %c0_30 = arith.constant 0 : index
    %c0_31 = arith.constant 0 : index
    %94 = vector.load %arg7[%c0_30, %c0_31] : memref<8x32xf32, #tpu.memory_space<vmem>>, vector<8x32xf32>
    %95 = vector.extract_strided_slice %93 {offsets = [0, 0], sizes = [8, 32], strides = [1, 1]} : vector<32x32xf32> to vector<8x32xf32>
    %96 = vector.extract_strided_slice %93 {offsets = [8, 0], sizes = [8, 32], strides = [1, 1]} : vector<32x32xf32> to vector<8x32xf32>
    %97 = arith.addf %95, %94 : vector<8x32xf32>
    %98 = arith.subf %97, %96 : vector<8x32xf32>
    %99 = arith.mulf %98, %98 : vector<8x32xf32>
    %cst_32 = arith.constant dense<0.000000e+00> : vector<8xf32>
    %100 = vector.multi_reduction <add>, %99, %cst_32 [1] : vector<8x32xf32> to vector<8xf32>
    %101 = vector.shape_cast %100 : vector<8xf32> to vector<8x1xf32>
    %102 = math.sqrt %101 : vector<8x1xf32>
    %103 = vector.extract_strided_slice %93 {offsets = [16, 0], sizes = [8, 32], strides = [1, 1]} : vector<32x32xf32> to vector<8x32xf32>
    %104 = vector.extract_strided_slice %93 {offsets = [24, 0], sizes = [8, 32], strides = [1, 1]} : vector<32x32xf32> to vector<8x32xf32>
    %105 = arith.addf %103, %94 : vector<8x32xf32>
    %106 = arith.subf %105, %104 : vector<8x32xf32>
    %107 = arith.mulf %106, %106 : vector<8x32xf32>
    %cst_33 = arith.constant dense<0.000000e+00> : vector<8xf32>
    %108 = vector.multi_reduction <add>, %107, %cst_33 [1] : vector<8x32xf32> to vector<8xf32>
    %109 = vector.shape_cast %108 : vector<8xf32> to vector<8x1xf32>
    %110 = math.sqrt %109 : vector<8x1xf32>
    %111 = arith.subf %102, %110 : vector<8x1xf32>
    %cst_34 = arith.constant 1.000000e+00 : f32
    %112 = vector.broadcast %cst_34 : f32 to vector<8x1xf32>
    %113 = arith.addf %111, %112 : vector<8x1xf32>
    %cst_35 = arith.constant 0.000000e+00 : f32
    %114 = vector.broadcast %cst_35 : f32 to vector<8x1xf32>
    %115 = arith.maximumf %114, %113 : vector<8x1xf32>
    %c0_36 = arith.constant 0 : index
    %c0_37 = arith.constant 0 : index
    %116 = vector.load %arg10[%c0_36, %c0_37] : memref<8x1xf32, #tpu.memory_space<vmem>>, vector<8x1xf32>
    tpu.vector_store %arg10[%c0_36, %c0_37], %115 {strides = array<i32>} : memref<8x1xf32, #tpu.memory_space<vmem>>, vector<8x1xf32>,
    return
  }
  func.func @transform_0(%arg0: i32, %arg1: memref<1xi32, #tpu.memory_space<smem>>) -> (i32, i32) {
    %c0_i32 = arith.constant 0 : i32
    %c0_i32_0 = arith.constant 0 : i32
    %c0_i32_1 = arith.constant 0 : i32
    return %c0_i32, %c0_i32_0 : i32, i32
  }
  func.func @transform_1(%arg0: i32, %arg1: memref<1xi32, #tpu.memory_space<smem>>) -> (i32, i32) {
    %c0_i32 = arith.constant 0 : i32
    %c0_i32_0 = arith.constant 0 : i32
    %c0_i32_1 = arith.constant 0 : i32
    return %c0_i32, %c0_i32_0 : i32, i32
  }
  func.func @transform_2(%arg0: i32, %arg1: memref<1xi32, #tpu.memory_space<smem>>) -> (i32, i32) {
    %c0_i32 = arith.constant 0 : i32
    %c0_i32_0 = arith.constant 0 : i32
    %c0_i32_1 = arith.constant 0 : i32
    return %c0_i32, %c0_i32_0 : i32, i32
  }
  func.func @transform_3(%arg0: i32, %arg1: memref<1xi32, #tpu.memory_space<smem>>) -> (i32, i32) {
    %c0_i32 = arith.constant 0 : i32
    %c0_i32_0 = arith.constant 0 : i32
    %c0_i32_1 = arith.constant 0 : i32
    return %c0_i32, %c0_i32_0 : i32, i32
  }
  func.func @transform_4(%arg0: i32, %arg1: memref<1xi32, #tpu.memory_space<smem>>) -> (i32, i32, i32) {
    %c0_i32 = arith.constant 0 : i32
    %c0_i32_0 = arith.constant 0 : i32
    %c0_i32_1 = arith.constant 0 : i32
    return %c0_i32, %arg0, %c0_i32_0 : i32, i32, i32
  }
  func.func @transform_5(%arg0: i32, %arg1: memref<1xi32, #tpu.memory_space<smem>>) -> (i32, i32) {
    %c0_i32 = arith.constant 0 : i32
    %c0_i32_0 = arith.constant 0 : i32
    return %arg0, %c0_i32 : i32, i32
  }
  func.func @transform_6(%arg0: i32, %arg1: memref<1xi32, #tpu.memory_space<smem>>) -> (i32, i32) {
    %c0_i32 = arith.constant 0 : i32
    %c0_i32_0 = arith.constant 0 : i32
    return %arg0, %c0_i32 : i32, i32
  }
  func.func @transform_7(%arg0: i32, %arg1: memref<1xi32, #tpu.memory_space<smem>>) -> (i32, i32) {
    %c0_i32 = arith.constant 0 : i32
    %c0_i32_0 = arith.constant 0 : i32
    return %arg0, %c0_i32 : i32, i32
  }
  func.func @transform_8(%arg0: i32, %arg1: memref<1xi32, #tpu.memory_space<smem>>) -> (i32, i32) {
    %c0_i32 = arith.constant 0 : i32
    %c0_i32_0 = arith.constant 0 : i32
    return %arg0, %c0_i32 : i32, i32
  }
}

</mosaic_0001>

<llo_original>
// kernel: tpu_custom_call.1
$region0: #{tpu_custom_call.1}
  #allocation0 [shape = 'u32[]', space=smem, size = 0x4, offset = 0x4, fixed_abs, tag = 'smem constant byte address 0x4 - core index']
  #allocation1 [shape = 'u32[144,128]{1,0:T(1,128)}', space=vmem, size = 0x12000, scoped, tag = 'internal scratch']
  #allocation2 [shape = 's32[1]{0}', space=sflag, size = 0x4, scoped, tag = 'scoped memory for tpu_custom_call.1']
  #allocation3 [shape = 's32[1]{0:T(128)S(6)}', space=smem, size = 0x200, scoped, tag = 'prefetched SMEM operand 0']
  %s0 = inlined_call_operand.<no memory space> [shape: s32[1], index: 0, kind: input, shape index: {}]
  %s1 = inlined_call_operand.vmem [shape: f32[4,1024], index: 1, kind: input, shape index: {}]
  %s2 = inlined_call_operand.vmem [shape: f32[4,1024], index: 2, kind: input, shape index: {}]
  %s3 = inlined_call_operand.vmem [shape: bf16[32,1024], index: 3, kind: input, shape index: {}]
  %s4 = inlined_call_operand.vmem [shape: f32[1024,32], index: 4, kind: input, shape index: {}]
  %s5 = inlined_call_operand.vmem [shape: f32[4,8,32], index: 5, kind: input, shape index: {}]
  %s6 = inlined_call_operand.vmem [shape: f32[8,32], index: 6, kind: input, shape index: {}]
  %s7 = inlined_call_operand.vmem [shape: s32[8,1], index: 7, kind: input, shape index: {}]
  %s8 = inlined_call_operand.vmem [shape: s32[8,4], index: 8, kind: input, shape index: {}]
  %s9 = inlined_call_operand.vmem [shape: f32[8,1], index: 9, kind: output, shape index: {}]
  %s10 = sld [smem:[#allocation0]]
  $region42: #{tpu_custom_call.1} parent=0
    _
  %s12 = ssub.s32 1, %s10
  %s13 = scalar_select 0, %s12, %s10
  %14 = sst [smem:[#allocation3]] %s0
  // Predicated region
  $region2: #{tpu_custom_call.1} parent=0 // pred_check
    _
  $region3: #{tpu_custom_call.1} parent=0 // pred_check_branch
    %16 = sbr.rel (0) target = $region5
  $region4: #{tpu_custom_call.1} parent=0 // pred_region
    _
  $region5: #{tpu_custom_call.1} parent=0 // pred_fallthru
    _
  // Predicated region
  $region6: #{tpu_custom_call.1} parent=0 // pred_check
    _
  $region7: #{tpu_custom_call.1} parent=0 // pred_check_branch
    %18 = sbr.rel (0) target = $region9
  $region8: #{tpu_custom_call.1} parent=0 // pred_region
    _
  $region9: #{tpu_custom_call.1} parent=0 // pred_fallthru
    _
  // Predicated region
  $region10: #{tpu_custom_call.1} parent=0 // pred_check
    _
  $region11: #{tpu_custom_call.1} parent=0 // pred_check_branch
    %20 = sbr.rel (0) target = $region13
  $region12: #{tpu_custom_call.1} parent=0 // pred_region
    _
  $region13: #{tpu_custom_call.1} parent=0 // pred_fallthru
    _
  // Predicated region
  $region14: #{tpu_custom_call.1} parent=0 // pred_check
    _
  $region15: #{tpu_custom_call.1} parent=0 // pred_check_branch
    %22 = sbr.rel (0) target = $region17
  $region16: #{tpu_custom_call.1} parent=0 // pred_region
    _
  $region17: #{tpu_custom_call.1} parent=0 // pred_fallthru
    _
  // Predicated region
  $region18: #{tpu_custom_call.1} parent=0 // pred_check
    _
  $region19: #{tpu_custom_call.1} parent=0 // pred_check_branch
    %24 = sbr.rel (0) target = $region21
  $region20: #{tpu_custom_call.1} parent=0 // pred_region
    _
  $region21: #{tpu_custom_call.1} parent=0 // pred_fallthru
    _
  // Predicated region
  $region22: #{tpu_custom_call.1} parent=0 // pred_check
    _
  $region23: #{tpu_custom_call.1} parent=0 // pred_check_branch
    %26 = sbr.rel (0) target = $region25
  $region24: #{tpu_custom_call.1} parent=0 // pred_region
    _
  $region25: #{tpu_custom_call.1} parent=0 // pred_fallthru
    _
  // Predicated region
  $region26: #{tpu_custom_call.1} parent=0 // pred_check
    _
  $region27: #{tpu_custom_call.1} parent=0 // pred_check_branch
    %28 = sbr.rel (0) target = $region29
  $region28: #{tpu_custom_call.1} parent=0 // pred_region
    _
  $region29: #{tpu_custom_call.1} parent=0 // pred_fallthru
    _
  // Predicated region
  $region30: #{tpu_custom_call.1} parent=0 // pred_check
    _
  $region31: #{tpu_custom_call.1} parent=0 // pred_check_branch
    %30 = sbr.rel (0) target = $region33
  $region32: #{tpu_custom_call.1} parent=0 // pred_region
    _
  $region33: #{tpu_custom_call.1} parent=0 // pred_fallthru
    _
  %v32 = vlaneseq
  %v33 = vand.u32 %v32, 127
  %v34 = vld [vmem:[%s7] sm:$0xff]
  %35 = vset.pattern.permute.xlu0 0
  %36 = vperm.xlu0 %35, %v34
  %v37 = vpop.permute.xlu0 %36
  %vm38 = vcmp.eq.s32.totalorder %v33, %v37
  %v39 = vsel %vm38, 1, 0
  %v40 = vcvt.s32.f32 %v39
  %v41 = vld [vmem:[%s1] sm:$0xff]
  %v42 = vld [vmem:[%s1 + $0x8] sm:$0xff]
  %v43 = vld [vmem:[%s1 + $0x10] sm:$0xff]
  %v44 = vld [vmem:[%s1 + $0x18] sm:$0xff]
  %v49 = vcombine.high %v41, %v41
  %v50 = vcombine.high %v42, %v42
  %v51 = vcombine.high %v43, %v43
  %v52 = vcombine.high %v44, %v44
  %vm53 = vcmask 31744
  %v55 = vsel %vm53, %v40, 0
  %vm57 = vcmask 1043456
  %v58 = vsel %vm57, %v41, 0
  %v60 = vsel %vm57, %v49, 0
  %v62 = vsel %vm57, %v42, 0
  %v64 = vsel %vm57, %v50, 0
  %v66 = vsel %vm57, %v43, 0
  %v68 = vsel %vm57, %v51, 0
  %v70 = vsel %vm57, %v44, 0
  %v72 = vsel %vm57, %v52, 0
  %74 = vmatprep.subr.mxu0 %v60
  %75 = vmatpush1.msra.mxu0 %v58
  %76 = vmatprep.subr.mxu0 0.0
  %77 = vmatpush1.msra.mxu0 0.0
  %78 = vmatprep.subr.mxu0 0.0
  %79 = vmatpush1.msra.mxu0 0.0
  %80 = vmatprep.subr.mxu0 0.0
  %81 = vmatpush1.msra.mxu0 0.0
  %82 = vmatprep.subr.mxu0 0.0
  %83 = vmatpush1.msra.mxu0 0.0
  %84 = vmatprep.subr.mxu0 0.0
  %85 = vmatpush1.msra.mxu0 0.0
  %86 = vmatprep.subr.mxu0 0.0
  %87 = vmatpush1.msra.mxu0 0.0
  %88 = vmatprep.subr.mxu0 0.0
  %89 = vmatpush1.msra.mxu0 0.0
  %90 = vmatprep.subr.mxu0 0.0
  %91 = vmatpush1.msra.mxu0 0.0
  %92 = vmatprep.subr.mxu0 0.0
  %93 = vmatpush1.msra.mxu0 0.0
  %94 = vmatprep.subr.mxu0 0.0
  %95 = vmatpush1.msra.mxu0 0.0
  %96 = vmatprep.subr.mxu0 0.0
  %97 = vmatpush1.msra.mxu0 0.0
  %98 = vmatprep.subr.mxu0 0.0
  %99 = vmatpush1.msra.mxu0 0.0
  %100 = vmatprep.subr.mxu0 0.0
  %101 = vmatpush1.msra.mxu0 0.0
  %102 = vmatprep.subr.mxu0 0.0
  %103 = vmatpush1.msra.mxu0 0.0
  %104 = vmatprep.subr.mxu0 0.0
  %105 = vmatpush1.msra.mxu0 0.0
  %106 = vmatprep.subr.mxu0 0.0
  %107 = vmatpush1.msra.mxu0 0.0
  %108 = vmatprep.subr.mxu0 0.0
  %109 = vmatpush1.msra.mxu0 0.0
  %110 = vmatprep.subr.mxu0 0.0
  %111 = vmatpush1.msra.mxu0 0.0
  %112 = vmatprep.subr.mxu0 0.0
  %113 = vmatpush1.msra.mxu0 0.0
  %114 = vmatprep.subr.mxu0 0.0
  %115 = vmatpush1.msra.mxu0 0.0
  %116 = vmatprep.subr.mxu0 0.0
  %117 = vmatpush1.msra.mxu0 0.0
  %118 = vmatprep.subr.mxu0 0.0
  %119 = vmatpush1.msra.mxu0 0.0
  %120 = vmatprep.subr.mxu0 0.0
  %121 = vmatpush1.msra.mxu0 0.0
  %122 = vmatprep.subr.mxu0 0.0
  %123 = vmatpush1.msra.mxu0 0.0
  %124 = vmatprep.subr.mxu0 0.0
  %125 = vmatpush1.msra.mxu0 0.0
  %126 = vmatprep.subr.mxu0 0.0
  %127 = vmatpush1.msra.mxu0 0.0
  %128 = vmatprep.subr.mxu0 0.0
  %129 = vmatpush1.msra.mxu0 0.0
  %130 = vmatprep.subr.mxu0 0.0
  %131 = vmatpush1.msra.mxu0 0.0
  %132 = vmatprep.subr.mxu0 0.0
  %133 = vmatpush1.msra.mxu0 0.0
  %134 = vmatprep.subr.mxu0 0.0
  %135 = vmatpush1.msra.mxu0 0.0
  %136 = vmatprep.subr.mxu0 0.0
  %137 = vmatpush1.msra.mxu0 0.0
  %138 = vmatprep.mubr.f32.mxu0 0.0
  %139 = vmatmul.mubr.f32.gmra.mrb[0].mxu0 %v55
  %v140 = vpop.f32.mrb[0].mxu0
  %v141 = vadd.f32 0.0, %v140
  %v142 = vpop.f32.mrb[0].mxu0
  %v143 = vadd.f32 0.0, %v142
  %144 = vdwg.mxu0
  %145 = vmatprep.subr.mxu0 %v64
  %146 = vmatpush1.msra.mxu0 %v62
  %147 = vmatprep.subr.mxu0 0.0
  %148 = vmatpush1.msra.mxu0 0.0
  %149 = vmatprep.subr.mxu0 0.0
  %150 = vmatpush1.msra.mxu0 0.0
  %151 = vmatprep.subr.mxu0 0.0
  %152 = vmatpush1.msra.mxu0 0.0
  %153 = vmatprep.subr.mxu0 0.0
  %154 = vmatpush1.msra.mxu0 0.0
  %155 = vmatprep.subr.mxu0 0.0
  %156 = vmatpush1.msra.mxu0 0.0
  %157 = vmatprep.subr.mxu0 0.0
  %158 = vmatpush1.msra.mxu0 0.0
  %159 = vmatprep.subr.mxu0 0.0
  %160 = vmatpush1.msra.mxu0 0.0
  %161 = vmatprep.subr.mxu0 0.0
  %162 = vmatpush1.msra.mxu0 0.0
  %163 = vmatprep.subr.mxu0 0.0
  %164 = vmatpush1.msra.mxu0 0.0
  %165 = vmatprep.subr.mxu0 0.0
  %166 = vmatpush1.msra.mxu0 0.0
  %167 = vmatprep.subr.mxu0 0.0
  %168 = vmatpush1.msra.mxu0 0.0
  %169 = vmatprep.subr.mxu0 0.0
  %170 = vmatpush1.msra.mxu0 0.0
  %171 = vmatprep.subr.mxu0 0.0
  %172 = vmatpush1.msra.mxu0 0.0
  %173 = vmatprep.subr.mxu0 0.0
  %174 = vmatpush1.msra.mxu0 0.0
  %175 = vmatprep.subr.mxu0 0.0
  %176 = vmatpush1.msra.mxu0 0.0
  %177 = vmatprep.subr.mxu0 0.0
  %178 = vmatpush1.msra.mxu0 0.0
  %179 = vmatprep.subr.mxu0 0.0
  %180 = vmatpush1.msra.mxu0 0.0
  %181 = vmatprep.subr.mxu0 0.0
  %182 = vmatpush1.msra.mxu0 0.0
  %183 = vmatprep.subr.mxu0 0.0
  %184 = vmatpush1.msra.mxu0 0.0
  %185 = vmatprep.subr.mxu0 0.0
  %186 = vmatpush1.msra.mxu0 0.0
  %187 = vmatprep.subr.mxu0 0.0
  %188 = vmatpush1.msra.mxu0 0.0
  %189 = vmatprep.subr.mxu0 0.0
  %190 = vmatpush1.msra.mxu0 0.0
  %191 = vmatprep.subr.mxu0 0.0
  %192 = vmatpush1.msra.mxu0 0.0
  %193 = vmatprep.subr.mxu0 0.0
  %194 = vmatpush1.msra.mxu0 0.0
  %195 = vmatprep.subr.mxu0 0.0
  %196 = vmatpush1.msra.mxu0 0.0
  %197 = vmatprep.subr.mxu0 0.0
  %198 = vmatpush1.msra.mxu0 0.0
  %199 = vmatprep.subr.mxu0 0.0
  %200 = vmatpush1.msra.mxu0 0.0
  %201 = vmatprep.subr.mxu0 0.0
  %202 = vmatpush1.msra.mxu0 0.0
  %203 = vmatprep.subr.mxu0 0.0
  %204 = vmatpush1.msra.mxu0 0.0
  %205 = vmatprep.subr.mxu0 0.0
  %206 = vmatpush1.msra.mxu0 0.0
  %207 = vmatprep.subr.mxu0 0.0
  %208 = vmatpush1.msra.mxu0 0.0
  %209 = vmatprep.mubr.f32.mxu0 0.0
  %210 = vmatmul.mubr.f32.gmra.mrb[0].mxu0 %v55
  %v211 = vpop.f32.mrb[0].mxu0
  %v212 = vadd.f32 0.0, %v211
  %v213 = vpop.f32.mrb[0].mxu0
  %v214 = vadd.f32 0.0, %v213
  %215 = vdwg.mxu0
  %216 = vmatprep.subr.mxu0 %v68
  %217 = vmatpush1.msra.mxu0 %v66
  %218 = vmatprep.subr.mxu0 0.0
  %219 = vmatpush1.msra.mxu0 0.0
  %220 = vmatprep.subr.mxu0 0.0
  %221 = vmatpush1.msra.mxu0 0.0
  %222 = vmatprep.subr.mxu0 0.0
  %223 = vmatpush1.msra.mxu0 0.0
  %224 = vmatprep.subr.mxu0 0.0
  %225 = vmatpush1.msra.mxu0 0.0
  %226 = vmatprep.subr.mxu0 0.0
  %227 = vmatpush1.msra.mxu0 0.0
  %228 = vmatprep.subr.mxu0 0.0
  %229 = vmatpush1.msra.mxu0 0.0
  %230 = vmatprep.subr.mxu0 0.0
  %231 = vmatpush1.msra.mxu0 0.0
  %232 = vmatprep.subr.mxu0 0.0
  %233 = vmatpush1.msra.mxu0 0.0
  %234 = vmatprep.subr.mxu0 0.0
  %235 = vmatpush1.msra.mxu0 0.0
  %236 = vmatprep.subr.mxu0 0.0
  %237 = vmatpush1.msra.mxu0 0.0
  %238 = vmatprep.subr.mxu0 0.0
  %239 = vmatpush1.msra.mxu0 0.0
  %240 = vmatprep.subr.mxu0 0.0
  %241 = vmatpush1.msra.mxu0 0.0
  %242 = vmatprep.subr.mxu0 0.0
  %243 = vmatpush1.msra.mxu0 0.0
  %244 = vmatprep.subr.mxu0 0.0
  %245 = vmatpush1.msra.mxu0 0.0
  %246 = vmatprep.subr.mxu0 0.0
  %247 = vmatpush1.msra.mxu0 0.0
  %248 = vmatprep.subr.mxu0 0.0
  %249 = vmatpush1.msra.mxu0 0.0
  %250 = vmatprep.subr.mxu0 0.0
  %251 = vmatpush1.msra.mxu0 0.0
  %252 = vmatprep.subr.mxu0 0.0
  %253 = vmatpush1.msra.mxu0 0.0
  %254 = vmatprep.subr.mxu0 0.0
  %255 = vmatpush1.msra.mxu0 0.0
  %256 = vmatprep.subr.mxu0 0.0
  %257 = vmatpush1.msra.mxu0 0.0
  %258 = vmatprep.subr.mxu0 0.0
  %259 = vmatpush1.msra.mxu0 0.0
  %260 = vmatprep.subr.mxu0 0.0
  %261 = vmatpush1.msra.mxu0 0.0
  %262 = vmatprep.subr.mxu0 0.0
  %263 = vmatpush1.msra.mxu0 0.0
  %264 = vmatprep.subr.mxu0 0.0
  %265 = vmatpush1.msra.mxu0 0.0
  %266 = vmatprep.subr.mxu0 0.0
  %267 = vmatpush1.msra.mxu0 0.0
  %268 = vmatprep.subr.mxu0 0.0
  %269 = vmatpush1.msra.mxu0 0.0
  %270 = vmatprep.subr.mxu0 0.0
  %271 = vmatpush1.msra.mxu0 0.0
  %272 = vmatprep.subr.mxu0 0.0
  %273 = vmatpush1.msra.mxu0 0.0
  %274 = vmatprep.subr.mxu0 0.0
  %275 = vmatpush1.msra.mxu0 0.0
  %276 = vmatprep.subr.mxu0 0.0
  %277 = vmatpush1.msra.mxu0 0.0
  %278 = vmatprep.subr.mxu0 0.0
  %279 = vmatpush1.msra.mxu0 0.0
  %280 = vmatprep.mubr.f32.mxu0 0.0
  %281 = vmatmul.mubr.f32.gmra.mrb[0].mxu0 %v55
  %v282 = vpop.f32.mrb[0].mxu0
  %v283 = vadd.f32 0.0, %v282
  %v284 = vpop.f32.mrb[0].mxu0
  %v285 = vadd.f32 0.0, %v284
  %286 = vdwg.mxu0
  %287 = vmatprep.subr.mxu0 %v72
  %288 = vmatpush1.msra.mxu0 %v70
  %289 = vmatprep.subr.mxu0 0.0
  %290 = vmatpush1.msra.mxu0 0.0
  %291 = vmatprep.subr.mxu0 0.0
  %292 = vmatpush1.msra.mxu0 0.0
  %293 = vmatprep.subr.mxu0 0.0
  %294 = vmatpush1.msra.mxu0 0.0
  %295 = vmatprep.subr.mxu0 0.0
  %296 = vmatpush1.msra.mxu0 0.0
  %297 = vmatprep.subr.mxu0 0.0
  %298 = vmatpush1.msra.mxu0 0.0
  %299 = vmatprep.subr.mxu0 0.0
  %300 = vmatpush1.msra.mxu0 0.0
  %301 = vmatprep.subr.mxu0 0.0
  %302 = vmatpush1.msra.mxu0 0.0
  %303 = vmatprep.subr.mxu0 0.0
  %304 = vmatpush1.msra.mxu0 0.0
  %305 = vmatprep.subr.mxu0 0.0
  %306 = vmatpush1.msra.mxu0 0.0
  %307 = vmatprep.subr.mxu0 0.0
  %308 = vmatpush1.msra.mxu0 0.0
  %309 = vmatprep.subr.mxu0 0.0
  %310 = vmatpush1.msra.mxu0 0.0
  %311 = vmatprep.subr.mxu0 0.0
  %312 = vmatpush1.msra.mxu0 0.0
  %313 = vmatprep.subr.mxu0 0.0
  %314 = vmatpush1.msra.mxu0 0.0
  %315 = vmatprep.subr.mxu0 0.0
  %316 = vmatpush1.msra.mxu0 0.0
  %317 = vmatprep.subr.mxu0 0.0
  %318 = vmatpush1.msra.mxu0 0.0
  %319 = vmatprep.subr.mxu0 0.0
  %320 = vmatpush1.msra.mxu0 0.0
  %321 = vmatprep.subr.mxu0 0.0
  %322 = vmatpush1.msra.mxu0 0.0
  %323 = vmatprep.subr.mxu0 0.0
  %324 = vmatpush1.msra.mxu0 0.0
  %325 = vmatprep.subr.mxu0 0.0
  %326 = vmatpush1.msra.mxu0 0.0
  %327 = vmatprep.subr.mxu0 0.0
  %328 = vmatpush1.msra.mxu0 0.0
  %329 = vmatprep.subr.mxu0 0.0
  %330 = vmatpush1.msra.mxu0 0.0
  %331 = vmatprep.subr.mxu0 0.0
  %332 = vmatpush1.msra.mxu0 0.0
  %333 = vmatprep.subr.mxu0 0.0
  %334 = vmatpush1.msra.mxu0 0.0
  %335 = vmatprep.subr.mxu0 0.0
  %336 = vmatpush1.msra.mxu0 0.0
  %337 = vmatprep.subr.mxu0 0.0
  %338 = vmatpush1.msra.mxu0 0.0
  %339 = vmatprep.subr.mxu0 0.0
  %340 = vmatpush1.msra.mxu0 0.0
  %341 = vmatprep.subr.mxu0 0.0
  %342 = vmatpush1.msra.mxu0 0.0
  %343 = vmatprep.subr.mxu0 0.0
  %344 = vmatpush1.msra.mxu0 0.0
  %345 = vmatprep.subr.mxu0 0.0
  %346 = vmatpush1.msra.mxu0 0.0
  %347 = vmatprep.subr.mxu0 0.0
  %348 = vmatpush1.msra.mxu0 0.0
  %349 = vmatprep.subr.mxu0 0.0
  %350 = vmatpush1.msra.mxu0 0.0
  %351 = vmatprep.mubr.f32.mxu0 0.0
  %352 = vmatmul.mubr.f32.gmra.mrb[0].mxu0 %v55
  %v353 = vpop.f32.mrb[0].mxu0
  %v354 = vadd.f32 0.0, %v353
  %v355 = vpop.f32.mrb[0].mxu0
  %v356 = vadd.f32 0.0, %v355
  %357 = vdwg.mxu0
  %v358 = vld [vmem:[%s2] sm:$0xff]
  %v359 = vld [vmem:[%s2 + $0x8] sm:$0xff]
  %v360 = vld [vmem:[%s2 + $0x10] sm:$0xff]
  %v361 = vld [vmem:[%s2 + $0x18] sm:$0xff]
  %v366 = vcombine.high %v358, %v358
  %v367 = vcombine.high %v359, %v359
  %v368 = vcombine.high %v360, %v360
  %v369 = vcombine.high %v361, %v361
  %v370 = vsel %vm57, %v358, 0
  %v372 = vsel %vm57, %v366, 0
  %v374 = vsel %vm57, %v359, 0
  %v376 = vsel %vm57, %v367, 0
  %v378 = vsel %vm57, %v360, 0
  %v380 = vsel %vm57, %v368, 0
  %v382 = vsel %vm57, %v361, 0
  %v384 = vsel %vm57, %v369, 0
  %386 = vmatprep.subr.mxu0 %v372
  %387 = vmatpush1.msra.mxu0 %v370
  %388 = vmatprep.subr.mxu0 0.0
  %389 = vmatpush1.msra.mxu0 0.0
  %390 = vmatprep.subr.mxu0 0.0
  %391 = vmatpush1.msra.mxu0 0.0
  %392 = vmatprep.subr.mxu0 0.0
  %393 = vmatpush1.msra.mxu0 0.0
  %394 = vmatprep.subr.mxu0 0.0
  %395 = vmatpush1.msra.mxu0 0.0
  %396 = vmatprep.subr.mxu0 0.0
  %397 = vmatpush1.msra.mxu0 0.0
  %398 = vmatprep.subr.mxu0 0.0
  %399 = vmatpush1.msra.mxu0 0.0
  %400 = vmatprep.subr.mxu0 0.0
  %401 = vmatpush1.msra.mxu0 0.0
  %402 = vmatprep.subr.mxu0 0.0
  %403 = vmatpush1.msra.mxu0 0.0
  %404 = vmatprep.subr.mxu0 0.0
  %405 = vmatpush1.msra.mxu0 0.0
  %406 = vmatprep.subr.mxu0 0.0
  %407 = vmatpush1.msra.mxu0 0.0
  %408 = vmatprep.subr.mxu0 0.0
  %409 = vmatpush1.msra.mxu0 0.0
  %410 = vmatprep.subr.mxu0 0.0
  %411 = vmatpush1.msra.mxu0 0.0
  %412 = vmatprep.subr.mxu0 0.0
  %413 = vmatpush1.msra.mxu0 0.0
  %414 = vmatprep.subr.mxu0 0.0
  %415 = vmatpush1.msra.mxu0 0.0
  %416 = vmatprep.subr.mxu0 0.0
  %417 = vmatpush1.msra.mxu0 0.0
  %418 = vmatprep.subr.mxu0 0.0
  %419 = vmatpush1.msra.mxu0 0.0
  %420 = vmatprep.subr.mxu0 0.0
  %421 = vmatpush1.msra.mxu0 0.0
  %422 = vmatprep.subr.mxu0 0.0
  %423 = vmatpush1.msra.mxu0 0.0
  %424 = vmatprep.subr.mxu0 0.0
  %425 = vmatpush1.msra.mxu0 0.0
  %426 = vmatprep.subr.mxu0 0.0
  %427 = vmatpush1.msra.mxu0 0.0
  %428 = vmatprep.subr.mxu0 0.0
  %429 = vmatpush1.msra.mxu0 0.0
  %430 = vmatprep.subr.mxu0 0.0
  %431 = vmatpush1.msra.mxu0 0.0
  %432 = vmatprep.subr.mxu0 0.0
  %433 = vmatpush1.msra.mxu0 0.0
  %434 = vmatprep.subr.mxu0 0.0
  %435 = vmatpush1.msra.mxu0 0.0
  %436 = vmatprep.subr.mxu0 0.0
  %437 = vmatpush1.msra.mxu0 0.0
  %438 = vmatprep.subr.mxu0 0.0
  %439 = vmatpush1.msra.mxu0 0.0
  %440 = vmatprep.subr.mxu0 0.0
  %441 = vmatpush1.msra.mxu0 0.0
  %442 = vmatprep.subr.mxu0 0.0
  %443 = vmatpush1.msra.mxu0 0.0
  %444 = vmatprep.subr.mxu0 0.0
  %445 = vmatpush1.msra.mxu0 0.0
  %446 = vmatprep.subr.mxu0 0.0
  %447 = vmatpush1.msra.mxu0 0.0
  %448 = vmatprep.subr.mxu0 0.0
  %449 = vmatpush1.msra.mxu0 0.0
  %450 = vmatprep.mubr.f32.mxu0 0.0
  %451 = vmatmul.mubr.f32.gmra.mrb[0].mxu0 %v55
  %v452 = vpop.f32.mrb[0].mxu0
  %v453 = vadd.f32 0.0, %v452
  %v454 = vpop.f32.mrb[0].mxu0
  %v455 = vadd.f32 0.0, %v454
  %456 = vdwg.mxu0
  %457 = vmatprep.subr.mxu0 %v376
  %458 = vmatpush1.msra.mxu0 %v374
  %459 = vmatprep.subr.mxu0 0.0
  %460 = vmatpush1.msra.mxu0 0.0
  %461 = vmatprep.subr.mxu0 0.0
  %462 = vmatpush1.msra.mxu0 0.0
  %463 = vmatprep.subr.mxu0 0.0
  %464 = vmatpush1.msra.mxu0 0.0
  %465 = vmatprep.subr.mxu0 0.0
  %466 = vmatpush1.msra.mxu0 0.0
  %467 = vmatprep.subr.mxu0 0.0
  %468 = vmatpush1.msra.mxu0 0.0
  %469 = vmatprep.subr.mxu0 0.0
  %470 = vmatpush1.msra.mxu0 0.0
  %471 = vmatprep.subr.mxu0 0.0
  %472 = vmatpush1.msra.mxu0 0.0
  %473 = vmatprep.subr.mxu0 0.0
  %474 = vmatpush1.msra.mxu0 0.0
  %475 = vmatprep.subr.mxu0 0.0
  %476 = vmatpush1.msra.mxu0 0.0
  %477 = vmatprep.subr.mxu0 0.0
  %478 = vmatpush1.msra.mxu0 0.0
  %479 = vmatprep.subr.mxu0 0.0
  %480 = vmatpush1.msra.mxu0 0.0
  %481 = vmatprep.subr.mxu0 0.0
  %482 = vmatpush1.msra.mxu0 0.0
  %483 = vmatprep.subr.mxu0 0.0
  %484 = vmatpush1.msra.mxu0 0.0
  %485 = vmatprep.subr.mxu0 0.0
  %486 = vmatpush1.msra.mxu0 0.0
  %487 = vmatprep.subr.mxu0 0.0
  %488 = vmatpush1.msra.mxu0 0.0
  %489 = vmatprep.subr.mxu0 0.0
  %490 = vmatpush1.msra.mxu0 0.0
  %491 = vmatprep.subr.mxu0 0.0
  %492 = vmatpush1.msra.mxu0 0.0
  %493 = vmatprep.subr.mxu0 0.0
  %494 = vmatpush1.msra.mxu0 0.0
  %495 = vmatprep.subr.mxu0 0.0
  %496 = vmatpush1.msra.mxu0 0.0
  %497 = vmatprep.subr.mxu0 0.0
  %498 = vmatpush1.msra.mxu0 0.0
  %499 = vmatprep.subr.mxu0 0.0
  %500 = vmatpush1.msra.mxu0 0.0
  %501 = vmatprep.subr.mxu0 0.0
  %502 = vmatpush1.msra.mxu0 0.0
  %503 = vmatprep.subr.mxu0 0.0
  %504 = vmatpush1.msra.mxu0 0.0
  %505 = vmatprep.subr.mxu0 0.0
  %506 = vmatpush1.msra.mxu0 0.0
  %507 = vmatprep.subr.mxu0 0.0
  %508 = vmatpush1.msra.mxu0 0.0
  %509 = vmatprep.subr.mxu0 0.0
  %510 = vmatpush1.msra.mxu0 0.0
  %511 = vmatprep.subr.mxu0 0.0
  %512 = vmatpush1.msra.mxu0 0.0
  %513 = vmatprep.subr.mxu0 0.0
  %514 = vmatpush1.msra.mxu0 0.0
  %515 = vmatprep.subr.mxu0 0.0
  %516 = vmatpush1.msra.mxu0 0.0
  %517 = vmatprep.subr.mxu0 0.0
  %518 = vmatpush1.msra.mxu0 0.0
  %519 = vmatprep.subr.mxu0 0.0
  %520 = vmatpush1.msra.mxu0 0.0
  %521 = vmatprep.mubr.f32.mxu0 0.0
  %522 = vmatmul.mubr.f32.gmra.mrb[0].mxu0 %v55
  %v523 = vpop.f32.mrb[0].mxu0
  %v524 = vadd.f32 0.0, %v523
  %v525 = vpop.f32.mrb[0].mxu0
  %v526 = vadd.f32 0.0, %v525
  %527 = vdwg.mxu0
  %528 = vmatprep.subr.mxu0 %v380
  %529 = vmatpush1.msra.mxu0 %v378
  %530 = vmatprep.subr.mxu0 0.0
  %531 = vmatpush1.msra.mxu0 0.0
  %532 = vmatprep.subr.mxu0 0.0
  %533 = vmatpush1.msra.mxu0 0.0
  %534 = vmatprep.subr.mxu0 0.0
  %535 = vmatpush1.msra.mxu0 0.0
  %536 = vmatprep.subr.mxu0 0.0
  %537 = vmatpush1.msra.mxu0 0.0
  %538 = vmatprep.subr.mxu0 0.0
  %539 = vmatpush1.msra.mxu0 0.0
  %540 = vmatprep.subr.mxu0 0.0
  %541 = vmatpush1.msra.mxu0 0.0
  %542 = vmatprep.subr.mxu0 0.0
  %543 = vmatpush1.msra.mxu0 0.0
  %544 = vmatprep.subr.mxu0 0.0
  %545 = vmatpush1.msra.mxu0 0.0
  %546 = vmatprep.subr.mxu0 0.0
  %547 = vmatpush1.msra.mxu0 0.0
  %548 = vmatprep.subr.mxu0 0.0
  %549 = vmatpush1.msra.mxu0 0.0
  %550 = vmatprep.subr.mxu0 0.0
  %551 = vmatpush1.msra.mxu0 0.0
  %552 = vmatprep.subr.mxu0 0.0
  %553 = vmatpush1.msra.mxu0 0.0
  %554 = vmatprep.subr.mxu0 0.0
  %555 = vmatpush1.msra.mxu0 0.0
  %556 = vmatprep.subr.mxu0 0.0
  %557 = vmatpush1.msra.mxu0 0.0
  %558 = vmatprep.subr.mxu0 0.0
  %559 = vmatpush1.msra.mxu0 0.0
  %560 = vmatprep.subr.mxu0 0.0
  %561 = vmatpush1.msra.mxu0 0.0
  %562 = vmatprep.subr.mxu0 0.0
  %563 = vmatpush1.msra.mxu0 0.0
  %564 = vmatprep.subr.mxu0 0.0
  %565 = vmatpush1.msra.mxu0 0.0
  %566 = vmatprep.subr.mxu0 0.0
  %567 = vmatpush1.msra.mxu0 0.0
  %568 = vmatprep.subr.mxu0 0.0
  %569 = vmatpush1.msra.mxu0 0.0
  %570 = vmatprep.subr.mxu0 0.0
  %571 = vmatpush1.msra.mxu0 0.0
  %572 = vmatprep.subr.mxu0 0.0
  %573 = vmatpush1.msra.mxu0 0.0
  %574 = vmatprep.subr.mxu0 0.0
  %575 = vmatpush1.msra.mxu0 0.0
  %576 = vmatprep.subr.mxu0 0.0
  %577 = vmatpush1.msra.mxu0 0.0
  %578 = vmatprep.subr.mxu0 0.0
  %579 = vmatpush1.msra.mxu0 0.0
  %580 = vmatprep.subr.mxu0 0.0
  %581 = vmatpush1.msra.mxu0 0.0
  %582 = vmatprep.subr.mxu0 0.0
  %583 = vmatpush1.msra.mxu0 0.0
  %584 = vmatprep.subr.mxu0 0.0
  %585 = vmatpush1.msra.mxu0 0.0
  %586 = vmatprep.subr.mxu0 0.0
  %587 = vmatpush1.msra.mxu0 0.0
  %588 = vmatprep.subr.mxu0 0.0
  %589 = vmatpush1.msra.mxu0 0.0
  %590 = vmatprep.subr.mxu0 0.0
  %591 = vmatpush1.msra.mxu0 0.0
  %592 = vmatprep.mubr.f32.mxu0 0.0
  %593 = vmatmul.mubr.f32.gmra.mrb[0].mxu0 %v55
  %v594 = vpop.f32.mrb[0].mxu0
  %v595 = vadd.f32 0.0, %v594
  %v596 = vpop.f32.mrb[0].mxu0
  %v597 = vadd.f32 0.0, %v596
  %598 = vdwg.mxu0
  %599 = vmatprep.subr.mxu0 %v384
  %600 = vmatpush1.msra.mxu0 %v382
  %601 = vmatprep.subr.mxu0 0.0
  %602 = vmatpush1.msra.mxu0 0.0
  %603 = vmatprep.subr.mxu0 0.0
  %604 = vmatpush1.msra.mxu0 0.0
  %605 = vmatprep.subr.mxu0 0.0
  %606 = vmatpush1.msra.mxu0 0.0
  %607 = vmatprep.subr.mxu0 0.0
  %608 = vmatpush1.msra.mxu0 0.0
  %609 = vmatprep.subr.mxu0 0.0
  %610 = vmatpush1.msra.mxu0 0.0
  %611 = vmatprep.subr.mxu0 0.0
  %612 = vmatpush1.msra.mxu0 0.0
  %613 = vmatprep.subr.mxu0 0.0
  %614 = vmatpush1.msra.mxu0 0.0
  %615 = vmatprep.subr.mxu0 0.0
  %616 = vmatpush1.msra.mxu0 0.0
  %617 = vmatprep.subr.mxu0 0.0
  %618 = vmatpush1.msra.mxu0 0.0
  %619 = vmatprep.subr.mxu0 0.0
  %620 = vmatpush1.msra.mxu0 0.0
  %621 = vmatprep.subr.mxu0 0.0
  %622 = vmatpush1.msra.mxu0 0.0
  %623 = vmatprep.subr.mxu0 0.0
  %624 = vmatpush1.msra.mxu0 0.0
  %625 = vmatprep.subr.mxu0 0.0
  %626 = vmatpush1.msra.mxu0 0.0
  %627 = vmatprep.subr.mxu0 0.0
  %628 = vmatpush1.msra.mxu0 0.0
  %629 = vmatprep.subr.mxu0 0.0
  %630 = vmatpush1.msra.mxu0 0.0
  %631 = vmatprep.subr.mxu0 0.0
  %632 = vmatpush1.msra.mxu0 0.0
  %633 = vmatprep.subr.mxu0 0.0
  %634 = vmatpush1.msra.mxu0 0.0
  %635 = vmatprep.subr.mxu0 0.0
  %636 = vmatpush1.msra.mxu0 0.0
  %637 = vmatprep.subr.mxu0 0.0
  %638 = vmatpush1.msra.mxu0 0.0
  %639 = vmatprep.subr.mxu0 0.0
  %640 = vmatpush1.msra.mxu0 0.0
  %641 = vmatprep.subr.mxu0 0.0
  %642 = vmatpush1.msra.mxu0 0.0
  %643 = vmatprep.subr.mxu0 0.0
  %644 = vmatpush1.msra.mxu0 0.0
  %645 = vmatprep.subr.mxu0 0.0
  %646 = vmatpush1.msra.mxu0 0.0
  %647 = vmatprep.subr.mxu0 0.0
  %648 = vmatpush1.msra.mxu0 0.0
  %649 = vmatprep.subr.mxu0 0.0
  %650 = vmatpush1.msra.mxu0 0.0
  %651 = vmatprep.subr.mxu0 0.0
  %652 = vmatpush1.msra.mxu0 0.0
  %653 = vmatprep.subr.mxu0 0.0
  %654 = vmatpush1.msra.mxu0 0.0
  %655 = vmatprep.subr.mxu0 0.0
  %656 = vmatpush1.msra.mxu0 0.0
  %657 = vmatprep.subr.mxu0 0.0
  %658 = vmatpush1.msra.mxu0 0.0
  %659 = vmatprep.subr.mxu0 0.0
  %660 = vmatpush1.msra.mxu0 0.0
  %661 = vmatprep.subr.mxu0 0.0
  %662 = vmatpush1.msra.mxu0 0.0
  %663 = vmatprep.mubr.f32.mxu0 0.0
  %664 = vmatmul.mubr.f32.gmra.mrb[0].mxu0 %v55
  %v665 = vpop.f32.mrb[0].mxu0
  %v666 = vadd.f32 0.0, %v665
  %v667 = vpop.f32.mrb[0].mxu0
  %v668 = vadd.f32 0.0, %v667
  %669 = vdwg.mxu0
  %v670 = vlaneseq
  %v671 = vshrl.u32 %v670, 7
  %v672 = vadd.s32 %v33, 128
  %v673 = vadd.s32 %v33, 256
  %v674 = vadd.s32 %v33, 384
  %v675 = vadd.s32 %v33, 512
  %v676 = vadd.s32 %v33, 640
  %v677 = vadd.s32 %v33, 768
  %v678 = vadd.s32 %v33, 896
  %s679 = smul.u32 0, 8
  %v680 = vstv %s679
  %v681 = vadd.s32 %v671, %v680
  %v682 = vmul.u32 %v681, 1024
  %v683 = vadd.s32 %v682, %v33
  %v684 = vadd.s32 %v682, %v672
  %v685 = vadd.s32 %v682, %v673
  %v686 = vadd.s32 %v682, %v674
  %v687 = vadd.s32 %v682, %v675
  %v688 = vadd.s32 %v682, %v676
  %v689 = vadd.s32 %v682, %v677
  %v690 = vadd.s32 %v682, %v678
  %v691 = vmul.u32 %v683, 2654435769
  %v692 = vmul.u32 %v684, 2654435769
  %v693 = vmul.u32 %v685, 2654435769
  %v694 = vmul.u32 %v686, 2654435769
  %v695 = vmul.u32 %v687, 2654435769
  %v696 = vmul.u32 %v688, 2654435769
  %v697 = vmul.u32 %v689, 2654435769
  %v698 = vmul.u32 %v690, 2654435769
  %s699 = sld [smem:[#allocation3]]
  %s700 = smul.u32 %s699, 3266489909
  %v701 = vstv %s700
  %v702 = vxor.u32 %v691, %v701
  %v703 = vxor.u32 %v692, %v701
  %v704 = vxor.u32 %v693, %v701
  %v705 = vxor.u32 %v694, %v701
  %v706 = vxor.u32 %v695, %v701
  %v707 = vxor.u32 %v696, %v701
  %v708 = vxor.u32 %v697, %v701
  %v709 = vxor.u32 %v698, %v701
  %v710 = vshra.s32 %v702, 16
  %v711 = vshra.s32 %v703, 16
  %v712 = vshra.s32 %v704, 16
  %v713 = vshra.s32 %v705, 16
  %v714 = vshra.s32 %v706, 16
  %v715 = vshra.s32 %v707, 16
  %v716 = vshra.s32 %v708, 16
  %v717 = vshra.s32 %v709, 16
  %v718 = vand.u32 %v710, 65535
  %v719 = vand.u32 %v711, 65535
  %v720 = vand.u32 %v712, 65535
  %v721 = vand.u32 %v713, 65535
  %v722 = vand.u32 %v714, 65535
  %v723 = vand.u32 %v715, 65535
  %v724 = vand.u32 %v716, 65535
  %v725 = vand.u32 %v717, 65535
  %v726 = vxor.u32 %v702, %v718
  %v727 = vxor.u32 %v703, %v719
  %v728 = vxor.u32 %v704, %v720
  %v729 = vxor.u32 %v705, %v721
  %v730 = vxor.u32 %v706, %v722
  %v731 = vxor.u32 %v707, %v723
  %v732 = vxor.u32 %v708, %v724
  %v733 = vxor.u32 %v709, %v725
  %v734 = vmul.u32 %v726, 2246822507
  %v735 = vmul.u32 %v727, 2246822507
  %v736 = vmul.u32 %v728, 2246822507
  %v737 = vmul.u32 %v729, 2246822507
  %v738 = vmul.u32 %v730, 2246822507
  %v739 = vmul.u32 %v731, 2246822507
  %v740 = vmul.u32 %v732, 2246822507
  %v741 = vmul.u32 %v733, 2246822507
  %v742 = vshra.s32 %v734, 13
  %v743 = vshra.s32 %v735, 13
  %v744 = vshra.s32 %v736, 13
  %v745 = vshra.s32 %v737, 13
  %v746 = vshra.s32 %v738, 13
  %v747 = vshra.s32 %v739, 13
  %v748 = vshra.s32 %v740, 13
  %v749 = vshra.s32 %v741, 13
  %v750 = vand.u32 %v742, 524287
  %v751 = vand.u32 %v743, 524287
  %v752 = vand.u32 %v744, 524287
  %v753 = vand.u32 %v745, 524287
  %v754 = vand.u32 %v746, 524287
  %v755 = vand.u32 %v747, 524287
  %v756 = vand.u32 %v748, 524287
  %v757 = vand.u32 %v749, 524287
  %v758 = vxor.u32 %v734, %v750
  %v759 = vxor.u32 %v735, %v751
  %v760 = vxor.u32 %v736, %v752
  %v761 = vxor.u32 %v737, %v753
  %v762 = vxor.u32 %v738, %v754
  %v763 = vxor.u32 %v739, %v755
  %v764 = vxor.u32 %v740, %v756
  %v765 = vxor.u32 %v741, %v757
  %v766 = vmul.u32 %v758, 3266489909
  %v767 = vmul.u32 %v759, 3266489909
  %v768 = vmul.u32 %v760, 3266489909
  %v769 = vmul.u32 %v761, 3266489909
  %v770 = vmul.u32 %v762, 3266489909
  %v771 = vmul.u32 %v763, 3266489909
  %v772 = vmul.u32 %v764, 3266489909
  %v773 = vmul.u32 %v765, 3266489909
  %v774 = vshra.s32 %v766, 16
  %v775 = vshra.s32 %v767, 16
  %v776 = vshra.s32 %v768, 16
  %v777 = vshra.s32 %v769, 16
  %v778 = vshra.s32 %v770, 16
  %v779 = vshra.s32 %v771, 16
  %v780 = vshra.s32 %v772, 16
  %v781 = vshra.s32 %v773, 16
  %v782 = vand.u32 %v774, 65535
  %v783 = vand.u32 %v775, 65535
  %v784 = vand.u32 %v776, 65535
  %v785 = vand.u32 %v777, 65535
  %v786 = vand.u32 %v778, 65535
  %v787 = vand.u32 %v779, 65535
  %v788 = vand.u32 %v780, 65535
  %v789 = vand.u32 %v781, 65535
  %v790 = vxor.u32 %v766, %v782
  %v791 = vxor.u32 %v767, %v783
  %v792 = vxor.u32 %v768, %v784
  %v793 = vxor.u32 %v769, %v785
  %v794 = vxor.u32 %v770, %v786
  %v795 = vxor.u32 %v771, %v787
  %v796 = vxor.u32 %v772, %v788
  %v797 = vxor.u32 %v773, %v789
  %v798 = vld [vmem:[%s8] sm:$0xff]
  %v799 = vld [vmem:[%s5] sm:$0xff]
  %v800 = vld [vmem:[%s5 + $0x8] sm:$0xff]
  %v801 = vld [vmem:[%s5 + $0x10] sm:$0xff]
  %v802 = vld [vmem:[%s5 + $0x18] sm:$0xff]
  %v803 = vpack.c.bf16 %v800, %v799
  %v804 = vpack.c.bf16 %v802, %v801
  %v805 = vld [vmem:[%s3] sm:$0xff]
  %v806 = vld [vmem:[%s3 + $0x8] sm:$0xff]
  %v807 = vld [vmem:[%s3 + $0x10] sm:$0xff]
  %v808 = vld [vmem:[%s3 + $0x18] sm:$0xff]
  %v809 = vld [vmem:[%s3 + $0x20] sm:$0xff]
  %v810 = vld [vmem:[%s3 + $0x28] sm:$0xff]
  %v811 = vld [vmem:[%s3 + $0x30] sm:$0xff]
  %v812 = vld [vmem:[%s3 + $0x38] sm:$0xff]
  %v813 = vld [vmem:[%s3 + $0x40] sm:$0xff]
  %v814 = vld [vmem:[%s3 + $0x48] sm:$0xff]
  %v815 = vld [vmem:[%s3 + $0x50] sm:$0xff]
  %v816 = vld [vmem:[%s3 + $0x58] sm:$0xff]
  %v817 = vld [vmem:[%s3 + $0x60] sm:$0xff]
  %v818 = vld [vmem:[%s3 + $0x68] sm:$0xff]
  %v819 = vld [vmem:[%s3 + $0x70] sm:$0xff]
  %v820 = vld [vmem:[%s3 + $0x78] sm:$0xff]
  %v837 = vunpack.c.l.b16 %v805
  %v838 = vunpack.c.h.b16 %v805
  %v839 = vunpack.c.l.b16 %v806
  %v840 = vunpack.c.h.b16 %v806
  %v841 = vunpack.c.l.b16 %v807
  %v842 = vunpack.c.h.b16 %v807
  %v843 = vunpack.c.l.b16 %v808
  %v844 = vunpack.c.h.b16 %v808
  %v845 = vunpack.c.l.b16 %v809
  %v846 = vunpack.c.h.b16 %v809
  %v847 = vunpack.c.l.b16 %v810
  %v848 = vunpack.c.h.b16 %v810
  %v849 = vunpack.c.l.b16 %v811
  %v850 = vunpack.c.h.b16 %v811
  %v851 = vunpack.c.l.b16 %v812
  %v852 = vunpack.c.h.b16 %v812
  %v853 = vunpack.c.l.b16 %v813
  %v854 = vunpack.c.h.b16 %v813
  %v855 = vunpack.c.l.b16 %v814
  %v856 = vunpack.c.h.b16 %v814
  %v857 = vunpack.c.l.b16 %v815
  %v858 = vunpack.c.h.b16 %v815
  %v859 = vunpack.c.l.b16 %v816
  %v860 = vunpack.c.h.b16 %v816
  %v861 = vunpack.c.l.b16 %v817
  %v862 = vunpack.c.h.b16 %v817
  %v863 = vunpack.c.l.b16 %v818
  %v864 = vunpack.c.h.b16 %v818
  %v865 = vunpack.c.l.b16 %v819
  %v866 = vunpack.c.h.b16 %v819
  %v867 = vunpack.c.l.b16 %v820
  %v868 = vunpack.c.h.b16 %v820
  %v869 = vpack.c.b16 %v845, %v837
  %v870 = vpack.c.b16 %v846, %v838
  %v871 = vpack.c.b16 %v847, %v839
  %v872 = vpack.c.b16 %v848, %v840
  %v873 = vpack.c.b16 %v849, %v841
  %v874 = vpack.c.b16 %v850, %v842
  %v875 = vpack.c.b16 %v851, %v843
  %v876 = vpack.c.b16 %v852, %v844
  %v877 = vpack.c.b16 %v861, %v853
  %v878 = vpack.c.b16 %v862, %v854
  %v879 = vpack.c.b16 %v863, %v855
  %v880 = vpack.c.b16 %v864, %v856
  %v881 = vpack.c.b16 %v865, %v857
  %v882 = vpack.c.b16 %v866, %v858
  %v883 = vpack.c.b16 %v867, %v859
  %v884 = vpack.c.b16 %v868, %v860
  %vm901 = vcmask 261120
  %v903 = vsel %vm901, %v803, 0
  %v906 = vsel %vm901, %v804, 0
  %908 = vmatprep.subr.bf16.mxu0 %v870
  %909 = vmatpush1.bf16.msra.mxu0 %v869
  %910 = vmatprep.subr.bf16.mxu0 %v878
  %911 = vmatpush1.bf16.msra.mxu0 %v877
  %912 = vmatprep.subr.bf16.mxu0 0
  %913 = vmatpush1.bf16.msra.mxu0 0
  %914 = vmatprep.subr.bf16.mxu0 0
  %915 = vmatpush1.bf16.msra.mxu0 0
  %916 = vmatprep.subr.bf16.mxu0 0
  %917 = vmatpush1.bf16.msra.mxu0 0
  %918 = vmatprep.subr.bf16.mxu0 0
  %919 = vmatpush1.bf16.msra.mxu0 0
  %920 = vmatprep.subr.bf16.mxu0 0
  %921 = vmatpush1.bf16.msra.mxu0 0
  %922 = vmatprep.subr.bf16.mxu0 0
  %923 = vmatpush1.bf16.msra.mxu0 0
  %924 = vmatprep.subr.bf16.mxu0 0
  %925 = vmatpush1.bf16.msra.mxu0 0
  %926 = vmatprep.subr.bf16.mxu0 0
  %927 = vmatpush1.bf16.msra.mxu0 0
  %928 = vmatprep.subr.bf16.mxu0 0
  %929 = vmatpush1.bf16.msra.mxu0 0
  %930 = vmatprep.subr.bf16.mxu0 0
  %931 = vmatpush1.bf16.msra.mxu0 0
  %932 = vmatprep.subr.bf16.mxu0 0
  %933 = vmatpush1.bf16.msra.mxu0 0
  %934 = vmatprep.subr.bf16.mxu0 0
  %935 = vmatpush1.bf16.msra.mxu0 0
  %936 = vmatprep.subr.bf16.mxu0 0
  %937 = vmatpush1.bf16.msra.mxu0 0
  %938 = vmatprep.subr.bf16.mxu0 0
  %939 = vmatpush1.bf16.msra.mxu0 0
  %940 = vmatprep.mubr.bf16.mxu0 0
  %941 = vmatmul.mubr.bf16.gmra.mrb[0].mxu0 %v903
  %v942 = vpop.f32.mrb[0].mxu0
  %v943 = vadd.f32 0.0, %v942
  %v944 = vpop.f32.mrb[0].mxu0
  %v945 = vadd.f32 0.0, %v944
  %v946 = vpop.f32.mrb[0].mxu0
  %v947 = vadd.f32 0.0, %v946
  %v948 = vpop.f32.mrb[0].mxu0
  %v949 = vadd.f32 0.0, %v948
  %950 = vmatprep.mubr.bf16.mxu0 0
  %951 = vmatmul.mubr.bf16.gmra.mrb[0].mxu0 %v906
  %v952 = vpop.f32.mrb[0].mxu0
  %v953 = vadd.f32 0.0, %v952
  %v954 = vpop.f32.mrb[0].mxu0
  %v955 = vadd.f32 0.0, %v954
  %v956 = vpop.f32.mrb[0].mxu0
  %v957 = vadd.f32 0.0, %v956
  %v958 = vpop.f32.mrb[0].mxu0
  %v959 = vadd.f32 0.0, %v958
  %960 = vdwg.mxu0
  %961 = vmatprep.subr.bf16.mxu0 %v872
  %962 = vmatpush1.bf16.msra.mxu0 %v871
  %963 = vmatprep.subr.bf16.mxu0 %v880
  %964 = vmatpush1.bf16.msra.mxu0 %v879
  %965 = vmatprep.subr.bf16.mxu0 0
  %966 = vmatpush1.bf16.msra.mxu0 0
  %967 = vmatprep.subr.bf16.mxu0 0
  %968 = vmatpush1.bf16.msra.mxu0 0
  %969 = vmatprep.subr.bf16.mxu0 0
  %970 = vmatpush1.bf16.msra.mxu0 0
  %971 = vmatprep.subr.bf16.mxu0 0
  %972 = vmatpush1.bf16.msra.mxu0 0
  %973 = vmatprep.subr.bf16.mxu0 0
  %974 = vmatpush1.bf16.msra.mxu0 0
  %975 = vmatprep.subr.bf16.mxu0 0
  %976 = vmatpush1.bf16.msra.mxu0 0
  %977 = vmatprep.subr.bf16.mxu0 0
  %978 = vmatpush1.bf16.msra.mxu0 0
  %979 = vmatprep.subr.bf16.mxu0 0
  %980 = vmatpush1.bf16.msra.mxu0 0
  %981 = vmatprep.subr.bf16.mxu0 0
  %982 = vmatpush1.bf16.msra.mxu0 0
  %983 = vmatprep.subr.bf16.mxu0 0
  %984 = vmatpush1.bf16.msra.mxu0 0
  %985 = vmatprep.subr.bf16.mxu0 0
  %986 = vmatpush1.bf16.msra.mxu0 0
  %987 = vmatprep.subr.bf16.mxu0 0
  %988 = vmatpush1.bf16.msra.mxu0 0
  %989 = vmatprep.subr.bf16.mxu0 0
  %990 = vmatpush1.bf16.msra.mxu0 0
  %991 = vmatprep.subr.bf16.mxu0 0
  %992 = vmatpush1.bf16.msra.mxu0 0
  %993 = vmatprep.mubr.bf16.mxu0 0
  %994 = vmatmul.mubr.bf16.gmra.mrb[0].mxu0 %v903
  %v995 = vpop.f32.mrb[0].mxu0
  %v996 = vadd.f32 0.0, %v995
  %v997 = vpop.f32.mrb[0].mxu0
  %v998 = vadd.f32 0.0, %v997
  %v999 = vpop.f32.mrb[0].mxu0
  %v1000 = vadd.f32 0.0, %v999
  %v1001 = vpop.f32.mrb[0].mxu0
  %v1002 = vadd.f32 0.0, %v1001
  %1003 = vmatprep.mubr.bf16.mxu0 0
  %1004 = vmatmul.mubr.bf16.gmra.mrb[0].mxu0 %v906
  %v1005 = vpop.f32.mrb[0].mxu0
  %v1006 = vadd.f32 0.0, %v1005
  %v1007 = vpop.f32.mrb[0].mxu0
  %v1008 = vadd.f32 0.0, %v1007
  %v1009 = vpop.f32.mrb[0].mxu0
  %v1010 = vadd.f32 0.0, %v1009
  %v1011 = vpop.f32.mrb[0].mxu0
  %v1012 = vadd.f32 0.0, %v1011
  %1013 = vdwg.mxu0
  %1014 = vmatprep.subr.bf16.mxu0 %v874
  %1015 = vmatpush1.bf16.msra.mxu0 %v873
  %1016 = vmatprep.subr.bf16.mxu0 %v882
  %1017 = vmatpush1.bf16.msra.mxu0 %v881
  %1018 = vmatprep.subr.bf16.mxu0 0
  %1019 = vmatpush1.bf16.msra.mxu0 0
  %1020 = vmatprep.subr.bf16.mxu0 0
  %1021 = vmatpush1.bf16.msra.mxu0 0
  %1022 = vmatprep.subr.bf16.mxu0 0
  %1023 = vmatpush1.bf16.msra.mxu0 0
  %1024 = vmatprep.subr.bf16.mxu0 0
  %1025 = vmatpush1.bf16.msra.mxu0 0
  %1026 = vmatprep.subr.bf16.mxu0 0
  %1027 = vmatpush1.bf16.msra.mxu0 0
  %1028 = vmatprep.subr.bf16.mxu0 0
  %1029 = vmatpush1.bf16.msra.mxu0 0
  %1030 = vmatprep.subr.bf16.mxu0 0
  %1031 = vmatpush1.bf16.msra.mxu0 0
  %1032 = vmatprep.subr.bf16.mxu0 0
  %1033 = vmatpush1.bf16.msra.mxu0 0
  %1034 = vmatprep.subr.bf16.mxu0 0
  %1035 = vmatpush1.bf16.msra.mxu0 0
  %1036 = vmatprep.subr.bf16.mxu0 0
  %1037 = vmatpush1.bf16.msra.mxu0 0
  %1038 = vmatprep.subr.bf16.mxu0 0
  %1039 = vmatpush1.bf16.msra.mxu0 0
  %1040 = vmatprep.subr.bf16.mxu0 0
  %1041 = vmatpush1.bf16.msra.mxu0 0
  %1042 = vmatprep.subr.bf16.mxu0 0
  %1043 = vmatpush1.bf16.msra.mxu0 0
  %1044 = vmatprep.subr.bf16.mxu0 0
  %1045 = vmatpush1.bf16.msra.mxu0 0
  %1046 = vmatprep.mubr.bf16.mxu0 0
  %1047 = vmatmul.mubr.bf16.gmra.mrb[0].mxu0 %v903
  %v1048 = vpop.f32.mrb[0].mxu0
  %v1049 = vadd.f32 0.0, %v1048
  %v1050 = vpop.f32.mrb[0].mxu0
  %v1051 = vadd.f32 0.0, %v1050
  %v1052 = vpop.f32.mrb[0].mxu0
  %v1053 = vadd.f32 0.0, %v1052
  %v1054 = vpop.f32.mrb[0].mxu0
  %v1055 = vadd.f32 0.0, %v1054
  %1056 = vmatprep.mubr.bf16.mxu0 0
  %1057 = vmatmul.mubr.bf16.gmra.mrb[0].mxu0 %v906
  %v1058 = vpop.f32.mrb[0].mxu0
  %v1059 = vadd.f32 0.0, %v1058
  %v1060 = vpop.f32.mrb[0].mxu0
  %v1061 = vadd.f32 0.0, %v1060
  %v1062 = vpop.f32.mrb[0].mxu0
  %v1063 = vadd.f32 0.0, %v1062
  %v1064 = vpop.f32.mrb[0].mxu0
  %v1065 = vadd.f32 0.0, %v1064
  %1066 = vdwg.mxu0
  %1067 = vmatprep.subr.bf16.mxu0 %v876
  %1068 = vmatpush1.bf16.msra.mxu0 %v875
  %1069 = vmatprep.subr.bf16.mxu0 %v884
  %1070 = vmatpush1.bf16.msra.mxu0 %v883
  %1071 = vmatprep.subr.bf16.mxu0 0
  %1072 = vmatpush1.bf16.msra.mxu0 0
  %1073 = vmatprep.subr.bf16.mxu0 0
  %1074 = vmatpush1.bf16.msra.mxu0 0
  %1075 = vmatprep.subr.bf16.mxu0 0
  %1076 = vmatpush1.bf16.msra.mxu0 0
  %1077 = vmatprep.subr.bf16.mxu0 0
  %1078 = vmatpush1.bf16.msra.mxu0 0
  %1079 = vmatprep.subr.bf16.mxu0 0
  %1080 = vmatpush1.bf16.msra.mxu0 0
  %1081 = vmatprep.subr.bf16.mxu0 0
  %1082 = vmatpush1.bf16.msra.mxu0 0
  %1083 = vmatprep.subr.bf16.mxu0 0
  %1084 = vmatpush1.bf16.msra.mxu0 0
  %1085 = vmatprep.subr.bf16.mxu0 0
  %1086 = vmatpush1.bf16.msra.mxu0 0
  %1087 = vmatprep.subr.bf16.mxu0 0
  %1088 = vmatpush1.bf16.msra.mxu0 0
  %1089 = vmatprep.subr.bf16.mxu0 0
  %1090 = vmatpush1.bf16.msra.mxu0 0
  %1091 = vmatprep.subr.bf16.mxu0 0
  %1092 = vmatpush1.bf16.msra.mxu0 0
  %1093 = vmatprep.subr.bf16.mxu0 0
  %1094 = vmatpush1.bf16.msra.mxu0 0
  %1095 = vmatprep.subr.bf16.mxu0 0
  %1096 = vmatpush1.bf16.msra.mxu0 0
  %1097 = vmatprep.subr.bf16.mxu0 0
  %1098 = vmatpush1.bf16.msra.mxu0 0
  %1099 = vmatprep.mubr.bf16.mxu0 0
  %1100 = vmatmul.mubr.bf16.gmra.mrb[0].mxu0 %v903
  %v1101 = vpop.f32.mrb[0].mxu0
  %v1102 = vadd.f32 0.0, %v1101
  %v1103 = vpop.f32.mrb[0].mxu0
  %v1104 = vadd.f32 0.0, %v1103
  %v1105 = vpop.f32.mrb[0].mxu0
  %v1106 = vadd.f32 0.0, %v1105
  %v1107 = vpop.f32.mrb[0].mxu0
  %v1108 = vadd.f32 0.0, %v1107
  %1109 = vmatprep.mubr.bf16.mxu0 0
  %1110 = vmatmul.mubr.bf16.gmra.mrb[0].mxu0 %v906
  %v1111 = vpop.f32.mrb[0].mxu0
  %v1112 = vadd.f32 0.0, %v1111
  %v1113 = vpop.f32.mrb[0].mxu0
  %v1114 = vadd.f32 0.0, %v1113
  %v1115 = vpop.f32.mrb[0].mxu0
  %v1116 = vadd.f32 0.0, %v1115
  %v1117 = vpop.f32.mrb[0].mxu0
  %v1118 = vadd.f32 0.0, %v1117
  %1119 = vdwg.mxu0
  %v1120 = vand.u32 %v790, 255
  %v1121 = vand.u32 %v791, 255
  %v1122 = vand.u32 %v792, 255
  %v1123 = vand.u32 %v793, 255
  %v1124 = vand.u32 %v794, 255
  %v1125 = vand.u32 %v795, 255
  %v1126 = vand.u32 %v796, 255
  %v1127 = vand.u32 %v797, 255
  %1128 = vset.pattern.permute.xlu0 0
  %1129 = vperm.xlu0 %1128, %v798
  %v1130 = vpop.permute.xlu0 %1129
  %vm1131 = vcmp.lt.s32.totalorder %v1120, %v1130
  %vm1132 = vcmp.lt.s32.totalorder %v1121, %v1130
  %vm1133 = vcmp.lt.s32.totalorder %v1122, %v1130
  %vm1134 = vcmp.lt.s32.totalorder %v1123, %v1130
  %vm1135 = vcmp.lt.s32.totalorder %v1124, %v1130
  %vm1136 = vcmp.lt.s32.totalorder %v1125, %v1130
  %vm1137 = vcmp.lt.s32.totalorder %v1126, %v1130
  %vm1138 = vcmp.lt.s32.totalorder %v1127, %v1130
  %v1139 = vmul.f32 %v141, %v943
  %v1140 = vmul.f32 %v143, %v945
  %v1141 = vmul.f32 %v212, %v996
  %v1142 = vmul.f32 %v214, %v998
  %v1143 = vmul.f32 %v283, %v1049
  %v1144 = vmul.f32 %v285, %v1051
  %v1145 = vmul.f32 %v354, %v1102
  %v1146 = vmul.f32 %v356, %v1104
  %v1147 = vsel %vm1131, %v1139, 0.0
  %v1148 = vsel %vm1132, %v1140, 0.0
  %v1149 = vsel %vm1133, %v1141, 0.0
  %v1150 = vsel %vm1134, %v1142, 0.0
  %v1151 = vsel %vm1135, %v1143, 0.0
  %v1152 = vsel %vm1136, %v1144, 0.0
  %v1153 = vsel %vm1137, %v1145, 0.0
  %v1154 = vsel %vm1138, %v1146, 0.0
  %v1155 = vshra.s32 %v790, 8
  %v1156 = vshra.s32 %v791, 8
  %v1157 = vshra.s32 %v792, 8
  %v1158 = vshra.s32 %v793, 8
  %v1159 = vshra.s32 %v794, 8
  %v1160 = vshra.s32 %v795, 8
  %v1161 = vshra.s32 %v796, 8
  %v1162 = vshra.s32 %v797, 8
  %v1163 = vand.u32 %v1155, 255
  %v1164 = vand.u32 %v1156, 255
  %v1165 = vand.u32 %v1157, 255
  %v1166 = vand.u32 %v1158, 255
  %v1167 = vand.u32 %v1159, 255
  %v1168 = vand.u32 %v1160, 255
  %v1169 = vand.u32 %v1161, 255
  %v1170 = vand.u32 %v1162, 255
  %1171 = vset.pattern.permute.xlu0 1
  %1172 = vperm.xlu0 %1171, %v798
  %v1173 = vpop.permute.xlu0 %1172
  %vm1174 = vcmp.lt.s32.totalorder %v1163, %v1173
  %vm1175 = vcmp.lt.s32.totalorder %v1164, %v1173
  %vm1176 = vcmp.lt.s32.totalorder %v1165, %v1173
  %vm1177 = vcmp.lt.s32.totalorder %v1166, %v1173
  %vm1178 = vcmp.lt.s32.totalorder %v1167, %v1173
  %vm1179 = vcmp.lt.s32.totalorder %v1168, %v1173
  %vm1180 = vcmp.lt.s32.totalorder %v1169, %v1173
  %vm1181 = vcmp.lt.s32.totalorder %v1170, %v1173
  %v1182 = vmul.f32 %v453, %v947
  %v1183 = vmul.f32 %v455, %v949
  %v1184 = vmul.f32 %v524, %v1000
  %v1185 = vmul.f32 %v526, %v1002
  %v1186 = vmul.f32 %v595, %v1053
  %v1187 = vmul.f32 %v597, %v1055
  %v1188 = vmul.f32 %v666, %v1106
  %v1189 = vmul.f32 %v668, %v1108
  %v1190 = vsel %vm1174, %v1182, 0.0
  %v1191 = vsel %vm1175, %v1183, 0.0
  %v1192 = vsel %vm1176, %v1184, 0.0
  %v1193 = vsel %vm1177, %v1185, 0.0
  %v1194 = vsel %vm1178, %v1186, 0.0
  %v1195 = vsel %vm1179, %v1187, 0.0
  %v1196 = vsel %vm1180, %v1188, 0.0
  %v1197 = vsel %vm1181, %v1189, 0.0
  %v1198 = vshra.s32 %v790, 16
  %v1199 = vshra.s32 %v791, 16
  %v1200 = vshra.s32 %v792, 16
  %v1201 = vshra.s32 %v793, 16
  %v1202 = vshra.s32 %v794, 16
  %v1203 = vshra.s32 %v795, 16
  %v1204 = vshra.s32 %v796, 16
  %v1205 = vshra.s32 %v797, 16
  %v1206 = vand.u32 %v1198, 255
  %v1207 = vand.u32 %v1199, 255
  %v1208 = vand.u32 %v1200, 255
  %v1209 = vand.u32 %v1201, 255
  %v1210 = vand.u32 %v1202, 255
  %v1211 = vand.u32 %v1203, 255
  %v1212 = vand.u32 %v1204, 255
  %v1213 = vand.u32 %v1205, 255
  %1214 = vset.pattern.permute.xlu0 2
  %1215 = vperm.xlu0 %1214, %v798
  %v1216 = vpop.permute.xlu0 %1215
  %vm1217 = vcmp.lt.s32.totalorder %v1206, %v1216
  %vm1218 = vcmp.lt.s32.totalorder %v1207, %v1216
  %vm1219 = vcmp.lt.s32.totalorder %v1208, %v1216
  %vm1220 = vcmp.lt.s32.totalorder %v1209, %v1216
  %vm1221 = vcmp.lt.s32.totalorder %v1210, %v1216
  %vm1222 = vcmp.lt.s32.totalorder %v1211, %v1216
  %vm1223 = vcmp.lt.s32.totalorder %v1212, %v1216
  %vm1224 = vcmp.lt.s32.totalorder %v1213, %v1216
  %v1225 = vmul.f32 %v141, %v953
  %v1226 = vmul.f32 %v143, %v955
  %v1227 = vmul.f32 %v212, %v1006
  %v1228 = vmul.f32 %v214, %v1008
  %v1229 = vmul.f32 %v283, %v1059
  %v1230 = vmul.f32 %v285, %v1061
  %v1231 = vmul.f32 %v354, %v1112
  %v1232 = vmul.f32 %v356, %v1114
  %v1233 = vsel %vm1217, %v1225, 0.0
  %v1234 = vsel %vm1218, %v1226, 0.0
  %v1235 = vsel %vm1219, %v1227, 0.0
  %v1236 = vsel %vm1220, %v1228, 0.0
  %v1237 = vsel %vm1221, %v1229, 0.0
  %v1238 = vsel %vm1222, %v1230, 0.0
  %v1239 = vsel %vm1223, %v1231, 0.0
  %v1240 = vsel %vm1224, %v1232, 0.0
  %v1241 = vshra.s32 %v790, 24
  %v1242 = vshra.s32 %v791, 24
  %v1243 = vshra.s32 %v792, 24
  %v1244 = vshra.s32 %v793, 24
  %v1245 = vshra.s32 %v794, 24
  %v1246 = vshra.s32 %v795, 24
  %v1247 = vshra.s32 %v796, 24
  %v1248 = vshra.s32 %v797, 24
  %v1249 = vand.u32 %v1241, 255
  %v1250 = vand.u32 %v1242, 255
  %v1251 = vand.u32 %v1243, 255
  %v1252 = vand.u32 %v1244, 255
  %v1253 = vand.u32 %v1245, 255
  %v1254 = vand.u32 %v1246, 255
  %v1255 = vand.u32 %v1247, 255
  %v1256 = vand.u32 %v1248, 255
  %1257 = vset.pattern.permute.xlu0 3
  %1258 = vperm.xlu0 %1257, %v798
  %v1259 = vpop.permute.xlu0 %1258
  %vm1260 = vcmp.lt.s32.totalorder %v1249, %v1259
  %vm1261 = vcmp.lt.s32.totalorder %v1250, %v1259
  %vm1262 = vcmp.lt.s32.totalorder %v1251, %v1259
  %vm1263 = vcmp.lt.s32.totalorder %v1252, %v1259
  %vm1264 = vcmp.lt.s32.totalorder %v1253, %v1259
  %vm1265 = vcmp.lt.s32.totalorder %v1254, %v1259
  %vm1266 = vcmp.lt.s32.totalorder %v1255, %v1259
  %vm1267 = vcmp.lt.s32.totalorder %v1256, %v1259
  %v1268 = vmul.f32 %v453, %v957
  %v1269 = vmul.f32 %v455, %v959
  %v1270 = vmul.f32 %v524, %v1010
  %v1271 = vmul.f32 %v526, %v1012
  %v1272 = vmul.f32 %v595, %v1063
  %v1273 = vmul.f32 %v597, %v1065
  %v1274 = vmul.f32 %v666, %v1116
  %v1275 = vmul.f32 %v668, %v1118
  %v1276 = vsel %vm1260, %v1268, 0.0
  %v1277 = vsel %vm1261, %v1269, 0.0
  %v1278 = vsel %vm1262, %v1270, 0.0
  %v1279 = vsel %vm1263, %v1271, 0.0
  %v1280 = vsel %vm1264, %v1272, 0.0
  %v1281 = vsel %vm1265, %v1273, 0.0
  %v1282 = vsel %vm1266, %v1274, 0.0
  %v1283 = vsel %vm1267, %v1275, 0.0
  %v1284 = vld [vmem:[%s4] sm:$0xff]
  %v1285 = vld [vmem:[%s4 + $0x8] sm:$0xff]
  %v1286 = vld [vmem:[%s4 + $0x10] sm:$0xff]
  %v1287 = vld [vmem:[%s4 + $0x18] sm:$0xff]
  %v1288 = vld [vmem:[%s4 + $0x20] sm:$0xff]
  %v1289 = vld [vmem:[%s4 + $0x28] sm:$0xff]
  %v1290 = vld [vmem:[%s4 + $0x30] sm:$0xff]
  %v1291 = vld [vmem:[%s4 + $0x38] sm:$0xff]
  %v1292 = vld [vmem:[%s4 + $0x40] sm:$0xff]
  %v1293 = vld [vmem:[%s4 + $0x48] sm:$0xff]
  %v1294 = vld [vmem:[%s4 + $0x50] sm:$0xff]
  %v1295 = vld [vmem:[%s4 + $0x58] sm:$0xff]
  %v1296 = vld [vmem:[%s4 + $0x60] sm:$0xff]
  %v1297 = vld [vmem:[%s4 + $0x68] sm:$0xff]
  %v1298 = vld [vmem:[%s4 + $0x70] sm:$0xff]
  %v1299 = vld [vmem:[%s4 + $0x78] sm:$0xff]
  %v1300 = vld [vmem:[%s4 + $0x80] sm:$0xff]
  %v1301 = vld [vmem:[%s4 + $0x88] sm:$0xff]
  %v1302 = vld [vmem:[%s4 + $0x90] sm:$0xff]
  %v1303 = vld [vmem:[%s4 + $0x98] sm:$0xff]
  %v1304 = vld [vmem:[%s4 + $0xa0] sm:$0xff]
  %v1305 = vld [vmem:[%s4 + $0xa8] sm:$0xff]
  %v1306 = vld [vmem:[%s4 + $0xb0] sm:$0xff]
  %v1307 = vld [vmem:[%s4 + $0xb8] sm:$0xff]
  %v1308 = vld [vmem:[%s4 + $0xc0] sm:$0xff]
  %v1309 = vld [vmem:[%s4 + $0xc8] sm:$0xff]
  %v1310 = vld [vmem:[%s4 + $0xd0] sm:$0xff]
  %v1311 = vld [vmem:[%s4 + $0xd8] sm:$0xff]
  %v1312 = vld [vmem:[%s4 + $0xe0] sm:$0xff]
  %v1313 = vld [vmem:[%s4 + $0xe8] sm:$0xff]
  %v1314 = vld [vmem:[%s4 + $0xf0] sm:$0xff]
  %v1315 = vld [vmem:[%s4 + $0xf8] sm:$0xff]
  %v1316 = vld [vmem:[%s4 + $0x100] sm:$0xff]
  %v1317 = vld [vmem:[%s4 + $0x108] sm:$0xff]
  %v1318 = vld [vmem:[%s4 + $0x110] sm:$0xff]
  %v1319 = vld [vmem:[%s4 + $0x118] sm:$0xff]
  %v1320 = vld [vmem:[%s4 + $0x120] sm:$0xff]
  %v1321 = vld [vmem:[%s4 + $0x128] sm:$0xff]
  %v1322 = vld [vmem:[%s4 + $0x130] sm:$0xff]
  %v1323 = vld [vmem:[%s4 + $0x138] sm:$0xff]
  %v1324 = vld [vmem:[%s4 + $0x140] sm:$0xff]
  %v1325 = vld [vmem:[%s4 + $0x148] sm:$0xff]
  %v1326 = vld [vmem:[%s4 + $0x150] sm:$0xff]
  %v1327 = vld [vmem:[%s4 + $0x158] sm:$0xff]
  %v1328 = vld [vmem:[%s4 + $0x160] sm:$0xff]
  %v1329 = vld [vmem:[%s4 + $0x168] sm:$0xff]
  %v1330 = vld [vmem:[%s4 + $0x170] sm:$0xff]
  %v1331 = vld [vmem:[%s4 + $0x178] sm:$0xff]
  %v1332 = vld [vmem:[%s4 + $0x180] sm:$0xff]
  %v1333 = vld [vmem:[%s4 + $0x188] sm:$0xff]
  %v1334 = vld [vmem:[%s4 + $0x190] sm:$0xff]
  %v1335 = vld [vmem:[%s4 + $0x198] sm:$0xff]
  %v1336 = vld [vmem:[%s4 + $0x1a0] sm:$0xff]
  %v1337 = vld [vmem:[%s4 + $0x1a8] sm:$0xff]
  %v1338 = vld [vmem:[%s4 + $0x1b0] sm:$0xff]
  %v1339 = vld [vmem:[%s4 + $0x1b8] sm:$0xff]
  %v1340 = vld [vmem:[%s4 + $0x1c0] sm:$0xff]
  %v1341 = vld [vmem:[%s4 + $0x1c8] sm:$0xff]
  %v1342 = vld [vmem:[%s4 + $0x1d0] sm:$0xff]
  %v1343 = vld [vmem:[%s4 + $0x1d8] sm:$0xff]
  %v1344 = vld [vmem:[%s4 + $0x1e0] sm:$0xff]
  %v1345 = vld [vmem:[%s4 + $0x1e8] sm:$0xff]
  %v1346 = vld [vmem:[%s4 + $0x1f0] sm:$0xff]
  %v1347 = vld [vmem:[%s4 + $0x1f8] sm:$0xff]
  %v1348 = vld [vmem:[%s4 + $0x200] sm:$0xff]
  %v1349 = vld [vmem:[%s4 + $0x208] sm:$0xff]
  %v1350 = vld [vmem:[%s4 + $0x210] sm:$0xff]
  %v1351 = vld [vmem:[%s4 + $0x218] sm:$0xff]
  %v1352 = vld [vmem:[%s4 + $0x220] sm:$0xff]
  %v1353 = vld [vmem:[%s4 + $0x228] sm:$0xff]
  %v1354 = vld [vmem:[%s4 + $0x230] sm:$0xff]
  %v1355 = vld [vmem:[%s4 + $0x238] sm:$0xff]
  %v1356 = vld [vmem:[%s4 + $0x240] sm:$0xff]
  %v1357 = vld [vmem:[%s4 + $0x248] sm:$0xff]
  %v1358 = vld [vmem:[%s4 + $0x250] sm:$0xff]
  %v1359 = vld [vmem:[%s4 + $0x258] sm:$0xff]
  %v1360 = vld [vmem:[%s4 + $0x260] sm:$0xff]
  %v1361 = vld [vmem:[%s4 + $0x268] sm:$0xff]
  %v1362 = vld [vmem:[%s4 + $0x270] sm:$0xff]
  %v1363 = vld [vmem:[%s4 + $0x278] sm:$0xff]
  %v1364 = vld [vmem:[%s4 + $0x280] sm:$0xff]
  %v1365 = vld [vmem:[%s4 + $0x288] sm:$0xff]
  %v1366 = vld [vmem:[%s4 + $0x290] sm:$0xff]
  %v1367 = vld [vmem:[%s4 + $0x298] sm:$0xff]
  %v1368 = vld [vmem:[%s4 + $0x2a0] sm:$0xff]
  %v1369 = vld [vmem:[%s4 + $0x2a8] sm:$0xff]
  %v1370 = vld [vmem:[%s4 + $0x2b0] sm:$0xff]
  %v1371 = vld [vmem:[%s4 + $0x2b8] sm:$0xff]
  %v1372 = vld [vmem:[%s4 + $0x2c0] sm:$0xff]
  %v1373 = vld [vmem:[%s4 + $0x2c8] sm:$0xff]
  %v1374 = vld [vmem:[%s4 + $0x2d0] sm:$0xff]
  %v1375 = vld [vmem:[%s4 + $0x2d8] sm:$0xff]
  %v1376 = vld [vmem:[%s4 + $0x2e0] sm:$0xff]
  %v1377 = vld [vmem:[%s4 + $0x2e8] sm:$0xff]
  %v1378 = vld [vmem:[%s4 + $0x2f0] sm:$0xff]
  %v1379 = vld [vmem:[%s4 + $0x2f8] sm:$0xff]
  %v1380 = vld [vmem:[%s4 + $0x300] sm:$0xff]
  %v1381 = vld [vmem:[%s4 + $0x308] sm:$0xff]
  %v1382 = vld [vmem:[%s4 + $0x310] sm:$0xff]
  %v1383 = vld [vmem:[%s4 + $0x318] sm:$0xff]
  %v1384 = vld [vmem:[%s4 + $0x320] sm:$0xff]
  %v1385 = vld [vmem:[%s4 + $0x328] sm:$0xff]
  %v1386 = vld [vmem:[%s4 + $0x330] sm:$0xff]
  %v1387 = vld [vmem:[%s4 + $0x338] sm:$0xff]
  %v1388 = vld [vmem:[%s4 + $0x340] sm:$0xff]
  %v1389 = vld [vmem:[%s4 + $0x348] sm:$0xff]
  %v1390 = vld [vmem:[%s4 + $0x350] sm:$0xff]
  %v1391 = vld [vmem:[%s4 + $0x358] sm:$0xff]
  %v1392 = vld [vmem:[%s4 + $0x360] sm:$0xff]
  %v1393 = vld [vmem:[%s4 + $0x368] sm:$0xff]
  %v1394 = vld [vmem:[%s4 + $0x370] sm:$0xff]
  %v1395 = vld [vmem:[%s4 + $0x378] sm:$0xff]
  %v1396 = vld [vmem:[%s4 + $0x380] sm:$0xff]
  %v1397 = vld [vmem:[%s4 + $0x388] sm:$0xff]
  %v1398 = vld [vmem:[%s4 + $0x390] sm:$0xff]
  %v1399 = vld [vmem:[%s4 + $0x398] sm:$0xff]
  %v1400 = vld [vmem:[%s4 + $0x3a0] sm:$0xff]
  %v1401 = vld [vmem:[%s4 + $0x3a8] sm:$0xff]
  %v1402 = vld [vmem:[%s4 + $0x3b0] sm:$0xff]
  %v1403 = vld [vmem:[%s4 + $0x3b8] sm:$0xff]
  %v1404 = vld [vmem:[%s4 + $0x3c0] sm:$0xff]
  %v1405 = vld [vmem:[%s4 + $0x3c8] sm:$0xff]
  %v1406 = vld [vmem:[%s4 + $0x3d0] sm:$0xff]
  %v1407 = vld [vmem:[%s4 + $0x3d8] sm:$0xff]
  %v1408 = vld [vmem:[%s4 + $0x3e0] sm:$0xff]
  %v1409 = vld [vmem:[%s4 + $0x3e8] sm:$0xff]
  %v1410 = vld [vmem:[%s4 + $0x3f0] sm:$0xff]
  %v1411 = vld [vmem:[%s4 + $0x3f8] sm:$0xff]
  %1412 = vmatprep.subr.mxu0 0.0
  %1413 = vmatpush1.msra.mxu0 %v1284
  %1414 = vmatprep.subr.mxu0 0.0
  %1415 = vmatpush1.msra.mxu0 %v1285
  %1416 = vmatprep.subr.mxu0 0.0
  %1417 = vmatpush1.msra.mxu0 %v1286
  %1418 = vmatprep.subr.mxu0 0.0
  %1419 = vmatpush1.msra.mxu0 %v1287
  %1420 = vmatprep.subr.mxu0 0.0
  %1421 = vmatpush1.msra.mxu0 %v1288
  %1422 = vmatprep.subr.mxu0 0.0
  %1423 = vmatpush1.msra.mxu0 %v1289
  %1424 = vmatprep.subr.mxu0 0.0
  %1425 = vmatpush1.msra.mxu0 %v1290
  %1426 = vmatprep.subr.mxu0 0.0
  %1427 = vmatpush1.msra.mxu0 %v1291
  %1428 = vmatprep.subr.mxu0 0.0
  %1429 = vmatpush1.msra.mxu0 %v1292
  %1430 = vmatprep.subr.mxu0 0.0
  %1431 = vmatpush1.msra.mxu0 %v1293
  %1432 = vmatprep.subr.mxu0 0.0
  %1433 = vmatpush1.msra.mxu0 %v1294
  %1434 = vmatprep.subr.mxu0 0.0
  %1435 = vmatpush1.msra.mxu0 %v1295
  %1436 = vmatprep.subr.mxu0 0.0
  %1437 = vmatpush1.msra.mxu0 %v1296
  %1438 = vmatprep.subr.mxu0 0.0
  %1439 = vmatpush1.msra.mxu0 %v1297
  %1440 = vmatprep.subr.mxu0 0.0
  %1441 = vmatpush1.msra.mxu0 %v1298
  %1442 = vmatprep.subr.mxu0 0.0
  %1443 = vmatpush1.msra.mxu0 %v1299
  %1444 = vmatprep.subr.mxu0 0.0
  %1445 = vmatpush1.msra.mxu0 %v1300
  %1446 = vmatprep.subr.mxu0 0.0
  %1447 = vmatpush1.msra.mxu0 %v1301
  %1448 = vmatprep.subr.mxu0 0.0
  %1449 = vmatpush1.msra.mxu0 %v1302
  %1450 = vmatprep.subr.mxu0 0.0
  %1451 = vmatpush1.msra.mxu0 %v1303
  %1452 = vmatprep.subr.mxu0 0.0
  %1453 = vmatpush1.msra.mxu0 %v1304
  %1454 = vmatprep.subr.mxu0 0.0
  %1455 = vmatpush1.msra.mxu0 %v1305
  %1456 = vmatprep.subr.mxu0 0.0
  %1457 = vmatpush1.msra.mxu0 %v1306
  %1458 = vmatprep.subr.mxu0 0.0
  %1459 = vmatpush1.msra.mxu0 %v1307
  %1460 = vmatprep.subr.mxu0 0.0
  %1461 = vmatpush1.msra.mxu0 %v1308
  %1462 = vmatprep.subr.mxu0 0.0
  %1463 = vmatpush1.msra.mxu0 %v1309
  %1464 = vmatprep.subr.mxu0 0.0
  %1465 = vmatpush1.msra.mxu0 %v1310
  %1466 = vmatprep.subr.mxu0 0.0
  %1467 = vmatpush1.msra.mxu0 %v1311
  %1468 = vmatprep.subr.mxu0 0.0
  %1469 = vmatpush1.msra.mxu0 %v1312
  %1470 = vmatprep.subr.mxu0 0.0
  %1471 = vmatpush1.msra.mxu0 %v1313
  %1472 = vmatprep.subr.mxu0 0.0
  %1473 = vmatpush1.msra.mxu0 %v1314
  %1474 = vmatprep.subr.mxu0 0.0
  %1475 = vmatpush1.msra.mxu0 %v1315
  %1476 = vmatprep.mubr.f32.mxu0 %v1148
  %1477 = vmatmul.mubr.f32.gmra.mrb[0].mxu0 %v1147
  %v1478 = vpop.f32.mrb[0].mxu0
  %v1479 = vadd.f32 0.0, %v1478
  %v1480 = vpop.f32.mrb[0].mxu0
  %1481 = vmatprep.mubr.f32.mxu0 %v1191
  %1482 = vmatmul.mubr.f32.gmra.mrb[0].mxu0 %v1190
  %v1483 = vpop.f32.mrb[0].mxu0
  %v1484 = vadd.f32 0.0, %v1483
  %v1485 = vpop.f32.mrb[0].mxu0
  %1486 = vmatprep.mubr.f32.mxu0 %v1234
  %1487 = vmatmul.mubr.f32.gmra.mrb[0].mxu0 %v1233
  %v1488 = vpop.f32.mrb[0].mxu0
  %v1489 = vadd.f32 0.0, %v1488
  %v1490 = vpop.f32.mrb[0].mxu0
  %1491 = vmatprep.mubr.f32.mxu0 %v1277
  %1492 = vmatmul.mubr.f32.gmra.mrb[0].mxu0 %v1276
  %v1493 = vpop.f32.mrb[0].mxu0
  %v1494 = vadd.f32 0.0, %v1493
  %v1495 = vpop.f32.mrb[0].mxu0
  %1496 = vdwg.mxu0
  %1497 = vmatprep.subr.mxu0 0.0
  %1498 = vmatpush1.msra.mxu0 %v1316
  %1499 = vmatprep.subr.mxu0 0.0
  %1500 = vmatpush1.msra.mxu0 %v1317
  %1501 = vmatprep.subr.mxu0 0.0
  %1502 = vmatpush1.msra.mxu0 %v1318
  %1503 = vmatprep.subr.mxu0 0.0
  %1504 = vmatpush1.msra.mxu0 %v1319
  %1505 = vmatprep.subr.mxu0 0.0
  %1506 = vmatpush1.msra.mxu0 %v1320
  %1507 = vmatprep.subr.mxu0 0.0
  %1508 = vmatpush1.msra.mxu0 %v1321
  %1509 = vmatprep.subr.mxu0 0.0
  %1510 = vmatpush1.msra.mxu0 %v1322
  %1511 = vmatprep.subr.mxu0 0.0
  %1512 = vmatpush1.msra.mxu0 %v1323
  %1513 = vmatprep.subr.mxu0 0.0
  %1514 = vmatpush1.msra.mxu0 %v1324
  %1515 = vmatprep.subr.mxu0 0.0
  %1516 = vmatpush1.msra.mxu0 %v1325
  %1517 = vmatprep.subr.mxu0 0.0
  %1518 = vmatpush1.msra.mxu0 %v1326
  %1519 = vmatprep.subr.mxu0 0.0
  %1520 = vmatpush1.msra.mxu0 %v1327
  %1521 = vmatprep.subr.mxu0 0.0
  %1522 = vmatpush1.msra.mxu0 %v1328
  %1523 = vmatprep.subr.mxu0 0.0
  %1524 = vmatpush1.msra.mxu0 %v1329
  %1525 = vmatprep.subr.mxu0 0.0
  %1526 = vmatpush1.msra.mxu0 %v1330
  %1527 = vmatprep.subr.mxu0 0.0
  %1528 = vmatpush1.msra.mxu0 %v1331
  %1529 = vmatprep.subr.mxu0 0.0
  %1530 = vmatpush1.msra.mxu0 %v1332
  %1531 = vmatprep.subr.mxu0 0.0
  %1532 = vmatpush1.msra.mxu0 %v1333
  %1533 = vmatprep.subr.mxu0 0.0
  %1534 = vmatpush1.msra.mxu0 %v1334
  %1535 = vmatprep.subr.mxu0 0.0
  %1536 = vmatpush1.msra.mxu0 %v1335
  %1537 = vmatprep.subr.mxu0 0.0
  %1538 = vmatpush1.msra.mxu0 %v1336
  %1539 = vmatprep.subr.mxu0 0.0
  %1540 = vmatpush1.msra.mxu0 %v1337
  %1541 = vmatprep.subr.mxu0 0.0
  %1542 = vmatpush1.msra.mxu0 %v1338
  %1543 = vmatprep.subr.mxu0 0.0
  %1544 = vmatpush1.msra.mxu0 %v1339
  %1545 = vmatprep.subr.mxu0 0.0
  %1546 = vmatpush1.msra.mxu0 %v1340
  %1547 = vmatprep.subr.mxu0 0.0
  %1548 = vmatpush1.msra.mxu0 %v1341
  %1549 = vmatprep.subr.mxu0 0.0
  %1550 = vmatpush1.msra.mxu0 %v1342
  %1551 = vmatprep.subr.mxu0 0.0
  %1552 = vmatpush1.msra.mxu0 %v1343
  %1553 = vmatprep.subr.mxu0 0.0
  %1554 = vmatpush1.msra.mxu0 %v1344
  %1555 = vmatprep.subr.mxu0 0.0
  %1556 = vmatpush1.msra.mxu0 %v1345
  %1557 = vmatprep.subr.mxu0 0.0
  %1558 = vmatpush1.msra.mxu0 %v1346
  %1559 = vmatprep.subr.mxu0 0.0
  %1560 = vmatpush1.msra.mxu0 %v1347
  %1561 = vmatprep.mubr.f32.mxu0 %v1150
  %1562 = vmatmul.mubr.f32.gmra.mrb[0].mxu0 %v1149
  %v1563 = vpop.f32.mrb[0].mxu0
  %v1564 = vadd.f32 %v1479, %v1563
  %v1565 = vpop.f32.mrb[0].mxu0
  %1566 = vmatprep.mubr.f32.mxu0 %v1193
  %1567 = vmatmul.mubr.f32.gmra.mrb[0].mxu0 %v1192
  %v1568 = vpop.f32.mrb[0].mxu0
  %v1569 = vadd.f32 %v1484, %v1568
  %v1570 = vpop.f32.mrb[0].mxu0
  %1571 = vmatprep.mubr.f32.mxu0 %v1236
  %1572 = vmatmul.mubr.f32.gmra.mrb[0].mxu0 %v1235
  %v1573 = vpop.f32.mrb[0].mxu0
  %v1574 = vadd.f32 %v1489, %v1573
  %v1575 = vpop.f32.mrb[0].mxu0
  %1576 = vmatprep.mubr.f32.mxu0 %v1279
  %1577 = vmatmul.mubr.f32.gmra.mrb[0].mxu0 %v1278
  %v1578 = vpop.f32.mrb[0].mxu0
  %v1579 = vadd.f32 %v1494, %v1578
  %v1580 = vpop.f32.mrb[0].mxu0
  %1581 = vdwg.mxu0
  %1582 = vmatprep.subr.mxu0 0.0
  %1583 = vmatpush1.msra.mxu0 %v1348
  %1584 = vmatprep.subr.mxu0 0.0
  %1585 = vmatpush1.msra.mxu0 %v1349
  %1586 = vmatprep.subr.mxu0 0.0
  %1587 = vmatpush1.msra.mxu0 %v1350
  %1588 = vmatprep.subr.mxu0 0.0
  %1589 = vmatpush1.msra.mxu0 %v1351
  %1590 = vmatprep.subr.mxu0 0.0
  %1591 = vmatpush1.msra.mxu0 %v1352
  %1592 = vmatprep.subr.mxu0 0.0
  %1593 = vmatpush1.msra.mxu0 %v1353
  %1594 = vmatprep.subr.mxu0 0.0
  %1595 = vmatpush1.msra.mxu0 %v1354
  %1596 = vmatprep.subr.mxu0 0.0
  %1597 = vmatpush1.msra.mxu0 %v1355
  %1598 = vmatprep.subr.mxu0 0.0
  %1599 = vmatpush1.msra.mxu0 %v1356
  %1600 = vmatprep.subr.mxu0 0.0
  %1601 = vmatpush1.msra.mxu0 %v1357
  %1602 = vmatprep.subr.mxu0 0.0
  %1603 = vmatpush1.msra.mxu0 %v1358
  %1604 = vmatprep.subr.mxu0 0.0
  %1605 = vmatpush1.msra.mxu0 %v1359
  %1606 = vmatprep.subr.mxu0 0.0
  %1607 = vmatpush1.msra.mxu0 %v1360
  %1608 = vmatprep.subr.mxu0 0.0
  %1609 = vmatpush1.msra.mxu0 %v1361
  %1610 = vmatprep.subr.mxu0 0.0
  %1611 = vmatpush1.msra.mxu0 %v1362
  %1612 = vmatprep.subr.mxu0 0.0
  %1613 = vmatpush1.msra.mxu0 %v1363
  %1614 = vmatprep.subr.mxu0 0.0
  %1615 = vmatpush1.msra.mxu0 %v1364
  %1616 = vmatprep.subr.mxu0 0.0
  %1617 = vmatpush1.msra.mxu0 %v1365
  %1618 = vmatprep.subr.mxu0 0.0
  %1619 = vmatpush1.msra.mxu0 %v1366
  %1620 = vmatprep.subr.mxu0 0.0
  %1621 = vmatpush1.msra.mxu0 %v1367
  %1622 = vmatprep.subr.mxu0 0.0
  %1623 = vmatpush1.msra.mxu0 %v1368
  %1624 = vmatprep.subr.mxu0 0.0
  %1625 = vmatpush1.msra.mxu0 %v1369
  %1626 = vmatprep.subr.mxu0 0.0
  %1627 = vmatpush1.msra.mxu0 %v1370
  %1628 = vmatprep.subr.mxu0 0.0
  %1629 = vmatpush1.msra.mxu0 %v1371
  %1630 = vmatprep.subr.mxu0 0.0
  %1631 = vmatpush1.msra.mxu0 %v1372
  %1632 = vmatprep.subr.mxu0 0.0
  %1633 = vmatpush1.msra.mxu0 %v1373
  %1634 = vmatprep.subr.mxu0 0.0
  %1635 = vmatpush1.msra.mxu0 %v1374
  %1636 = vmatprep.subr.mxu0 0.0
  %1637 = vmatpush1.msra.mxu0 %v1375
  %1638 = vmatprep.subr.mxu0 0.0
  %1639 = vmatpush1.msra.mxu0 %v1376
  %1640 = vmatprep.subr.mxu0 0.0
  %1641 = vmatpush1.msra.mxu0 %v1377
  %1642 = vmatprep.subr.mxu0 0.0
  %1643 = vmatpush1.msra.mxu0 %v1378
  %1644 = vmatprep.subr.mxu0 0.0
  %1645 = vmatpush1.msra.mxu0 %v1379
  %1646 = vmatprep.mubr.f32.mxu0 %v1152
  %1647 = vmatmul.mubr.f32.gmra.mrb[0].mxu0 %v1151
  %v1648 = vpop.f32.mrb[0].mxu0
  %v1649 = vadd.f32 %v1564, %v1648
  %v1650 = vpop.f32.mrb[0].mxu0
  %1651 = vmatprep.mubr.f32.mxu0 %v1195
  %1652 = vmatmul.mubr.f32.gmra.mrb[0].mxu0 %v1194
  %v1653 = vpop.f32.mrb[0].mxu0
  %v1654 = vadd.f32 %v1569, %v1653
  %v1655 = vpop.f32.mrb[0].mxu0
  %1656 = vmatprep.mubr.f32.mxu0 %v1238
  %1657 = vmatmul.mubr.f32.gmra.mrb[0].mxu0 %v1237
  %v1658 = vpop.f32.mrb[0].mxu0
  %v1659 = vadd.f32 %v1574, %v1658
  %v1660 = vpop.f32.mrb[0].mxu0
  %1661 = vmatprep.mubr.f32.mxu0 %v1281
  %1662 = vmatmul.mubr.f32.gmra.mrb[0].mxu0 %v1280
  %v1663 = vpop.f32.mrb[0].mxu0
  %v1664 = vadd.f32 %v1579, %v1663
  %v1665 = vpop.f32.mrb[0].mxu0
  %1666 = vdwg.mxu0
  %1667 = vmatprep.subr.mxu0 0.0
  %1668 = vmatpush1.msra.mxu0 %v1380
  %1669 = vmatprep.subr.mxu0 0.0
  %1670 = vmatpush1.msra.mxu0 %v1381
  %1671 = vmatprep.subr.mxu0 0.0
  %1672 = vmatpush1.msra.mxu0 %v1382
  %1673 = vmatprep.subr.mxu0 0.0
  %1674 = vmatpush1.msra.mxu0 %v1383
  %1675 = vmatprep.subr.mxu0 0.0
  %1676 = vmatpush1.msra.mxu0 %v1384
  %1677 = vmatprep.subr.mxu0 0.0
  %1678 = vmatpush1.msra.mxu0 %v1385
  %1679 = vmatprep.subr.mxu0 0.0
  %1680 = vmatpush1.msra.mxu0 %v1386
  %1681 = vmatprep.subr.mxu0 0.0
  %1682 = vmatpush1.msra.mxu0 %v1387
  %1683 = vmatprep.subr.mxu0 0.0
  %1684 = vmatpush1.msra.mxu0 %v1388
  %1685 = vmatprep.subr.mxu0 0.0
  %1686 = vmatpush1.msra.mxu0 %v1389
  %1687 = vmatprep.subr.mxu0 0.0
  %1688 = vmatpush1.msra.mxu0 %v1390
  %1689 = vmatprep.subr.mxu0 0.0
  %1690 = vmatpush1.msra.mxu0 %v1391
  %1691 = vmatprep.subr.mxu0 0.0
  %1692 = vmatpush1.msra.mxu0 %v1392
  %1693 = vmatprep.subr.mxu0 0.0
  %1694 = vmatpush1.msra.mxu0 %v1393
  %1695 = vmatprep.subr.mxu0 0.0
  %1696 = vmatpush1.msra.mxu0 %v1394
  %1697 = vmatprep.subr.mxu0 0.0
  %1698 = vmatpush1.msra.mxu0 %v1395
  %1699 = vmatprep.subr.mxu0 0.0
  %1700 = vmatpush1.msra.mxu0 %v1396
  %1701 = vmatprep.subr.mxu0 0.0
  %1702 = vmatpush1.msra.mxu0 %v1397
  %1703 = vmatprep.subr.mxu0 0.0
  %1704 = vmatpush1.msra.mxu0 %v1398
  %1705 = vmatprep.subr.mxu0 0.0
  %1706 = vmatpush1.msra.mxu0 %v1399
  %1707 = vmatprep.subr.mxu0 0.0
  %1708 = vmatpush1.msra.mxu0 %v1400
  %1709 = vmatprep.subr.mxu0 0.0
  %1710 = vmatpush1.msra.mxu0 %v1401
  %1711 = vmatprep.subr.mxu0 0.0
  %1712 = vmatpush1.msra.mxu0 %v1402
  %1713 = vmatprep.subr.mxu0 0.0
  %1714 = vmatpush1.msra.mxu0 %v1403
  %1715 = vmatprep.subr.mxu0 0.0
  %1716 = vmatpush1.msra.mxu0 %v1404
  %1717 = vmatprep.subr.mxu0 0.0
  %1718 = vmatpush1.msra.mxu0 %v1405
  %1719 = vmatprep.subr.mxu0 0.0
  %1720 = vmatpush1.msra.mxu0 %v1406
  %1721 = vmatprep.subr.mxu0 0.0
  %1722 = vmatpush1.msra.mxu0 %v1407
  %1723 = vmatprep.subr.mxu0 0.0
  %1724 = vmatpush1.msra.mxu0 %v1408
  %1725 = vmatprep.subr.mxu0 0.0
  %1726 = vmatpush1.msra.mxu0 %v1409
  %1727 = vmatprep.subr.mxu0 0.0
  %1728 = vmatpush1.msra.mxu0 %v1410
  %1729 = vmatprep.subr.mxu0 0.0
  %1730 = vmatpush1.msra.mxu0 %v1411
  %1731 = vmatprep.mubr.f32.mxu0 %v1154
  %1732 = vmatmul.mubr.f32.gmra.mrb[0].mxu0 %v1153
  %v1733 = vpop.f32.mrb[0].mxu0
  %v1734 = vadd.f32 %v1649, %v1733
  %v1735 = vpop.f32.mrb[0].mxu0
  %1736 = vmatprep.mubr.f32.mxu0 %v1197
  %1737 = vmatmul.mubr.f32.gmra.mrb[0].mxu0 %v1196
  %v1738 = vpop.f32.mrb[0].mxu0
  %v1739 = vadd.f32 %v1654, %v1738
  %v1740 = vpop.f32.mrb[0].mxu0
  %1741 = vmatprep.mubr.f32.mxu0 %v1240
  %1742 = vmatmul.mubr.f32.gmra.mrb[0].mxu0 %v1239
  %v1743 = vpop.f32.mrb[0].mxu0
  %v1744 = vadd.f32 %v1659, %v1743
  %v1745 = vpop.f32.mrb[0].mxu0
  %1746 = vmatprep.mubr.f32.mxu0 %v1283
  %1747 = vmatmul.mubr.f32.gmra.mrb[0].mxu0 %v1282
  %v1748 = vpop.f32.mrb[0].mxu0
  %v1749 = vadd.f32 %v1664, %v1748
  %v1750 = vpop.f32.mrb[0].mxu0
  %1751 = vdwg.mxu0
  %v1752 = vld [vmem:[%s6] sm:$0xff]
  %v1753 = vadd.f32 %v1734, %v1752
  %v1754 = vsub.f32 %v1753, %v1739
  %v1755 = vmul.f32 %v1754, %v1754
  %v1756 = vsel %vm901, %v1755, 0.0
  %1757 = vadd.xlane.f32.xlu0 %v1756
  %v1758 = vpop.xlane.xlu0 %1757
  %v1759 = vrsqrt.pop %v1758
  %v1760 = vmul.f32 %v1758, %v1759
  %vm1761 = vcmp.eq.f32.partialorder %v1758, inf
  %v1762 = vsel %vm1761, %v1758, %v1760
  %vm1763 = vcmp.eq.f32.partialorder %v1758, 0.0
  %v1764 = vand.u32 %v1758, 2147483648
  %v1765 = vsel %vm1763, %v1764, %v1762
  %v1766 = vadd.f32 %v1744, %v1752
  %v1767 = vsub.f32 %v1766, %v1749
  %v1768 = vmul.f32 %v1767, %v1767
  %v1769 = vsel %vm901, %v1768, 0.0
  %1770 = vadd.xlane.f32.xlu0 %v1769
  %v1771 = vpop.xlane.xlu0 %1770
  %v1772 = vrsqrt.pop %v1771
  %v1773 = vmul.f32 %v1771, %v1772
  %vm1774 = vcmp.eq.f32.partialorder %v1771, inf
  %v1775 = vsel %vm1774, %v1771, %v1773
  %vm1776 = vcmp.eq.f32.partialorder %v1771, 0.0
  %v1777 = vand.u32 %v1771, 2147483648
  %v1778 = vsel %vm1776, %v1777, %v1775
  %v1779 = vsub.f32 %v1765, %v1778
  %v1780 = vadd.f32 %v1779, 1.0
  %v1781 = vmax.f32 %v1780, 0.0
  %vm1782 = vcmask 7168
  %1783 = vst.msk [vmem:[%s9] sm:$0xff] %vm1782, %v1781
  // Predicated region
  $region34: #{tpu_custom_call.1} parent=0 // pred_check
    _
  $region35: #{tpu_custom_call.1} parent=0 // pred_check_branch
    %1785 = sbr.rel (0) target = $region37
  $region36: #{tpu_custom_call.1} parent=0 // pred_region
    _
  $region37: #{tpu_custom_call.1} parent=0 // pred_fallthru
    _
  // Predicated region
  $region38: #{tpu_custom_call.1} parent=0 // pred_check
    _
  $region39: #{tpu_custom_call.1} parent=0 // pred_check_branch
    %1787 = sbr.rel (0) target = $region41
  $region40: #{tpu_custom_call.1} parent=0 // pred_region
    _
  $region41: #{tpu_custom_call.1} parent=0 // pred_fallthru
    _

</llo_original>
